<compile_context>
chip_gen: v5e
topology: v5e:2x2
jax: 0.10.0
libtpu: 0.0.40
codegen_flags: <defaults>
</compile_context>

<pallas_src>
import functools

import jax
import jax.numpy as jnp
from jax.experimental import pallas as pl
from jax.experimental.pallas import tpu as pltpu

# ---------------- configuration ----------------
N_AGENTS = 8
OBS_DIM = 16
HID = 32
HID2 = 2 * HID            # width of the duplicated activation layout
N_ACTIONS = 5
COMM_PASSES = 2
COMM_MODE_AVG = True      # args.comm_mode == 'avg'
INIT_STD = 0.2
OUT_W = 8                 # compact packed output: [0:5]=log-probs, [5]=value, [6:8]=zeros
SLAB_W = 128              # packed parameter slab lane width
CHUNK = 32                # envs per grid step -> M = 256 rows per MXU op (v6e/v7x fill)


def _ceil8(n):
    return ((n + 7) // 8) * 8


# Row offsets inside the packed parameter slab (all segment starts 8-aligned).
ENC_W_OFF = 0                                  # (OBS_DIM, 2*HID)   encoder weight (duplicated cols)
ENC_B_OFF = ENC_W_OFF + OBS_DIM                # (1, 2*HID)         encoder bias
CF_W_OFF = _ceil8(ENC_B_OFF + 1)               # per pass: (2*HID, 2*HID) fused [scale*C_w ; f_w]
CF_B_OFF = CF_W_OFF + COMM_PASSES * HID2       # per pass: (1, 2*HID)     fused C_b + f_b
HV_W_OFF = CF_B_OFF + COMM_PASSES * 8          # (2*HID, 128)       fused [head_w | val_w | 0]
HV_B_OFF = HV_W_OFF + HID2                     # (1, 128)
SLAB_ROWS = _ceil8(HV_B_OFF + 1)               # 240


# ---------------- Pallas kernel ----------------
def commnet_kernel(x_ref, w_ref, out_ref, *, chunk):
    # x_ref:   (chunk*N_AGENTS, OBS_DIM)  observations of `chunk` environments
    # w_ref:   (SLAB_ROWS, 128)           packed parameter slab (see pack_params)
    # out_ref: (chunk*N_AGENTS, OUT_W)    compact [log-probs(5) | value(1) | 0, 0]
    m_rows = chunk * N_AGENTS
    x = x_ref[...]

    # ---- forward_state_encoder: x_enc = tanh(encoder(x)) ----
    # Activations carry the 32 features twice (lanes [0:32] and [32:64]); the encoder
    # weight columns are duplicated in the slab so x_enc comes out duplicated too.
    enc_w = w_ref[ENC_W_OFF:ENC_W_OFF + OBS_DIM, :HID2]          # (16, 64)
    enc_b = w_ref[ENC_B_OFF:ENC_B_OFF + 1, :HID2]                # (1, 64)
    x_enc = jnp.tanh(
        jnp.dot(x, enc_w, preferred_element_type=jnp.float32) + enc_b)   # (M, 64)
    hidden = x_enc

    lane = jax.lax.broadcasted_iota(jnp.int32, (m_rows, HID2), 1)
    comm_half = lane < HID                                       # lanes [0:32] = comm slot

    # ---- comm passes (fused C/f matmul; avg 1/(n-1) scale folded into weights) ----
    for i in range(COMM_PASSES):
        rw = CF_W_OFF + i * HID2
        rb = CF_B_OFF + i * 8
        cf_w = w_ref[rw:rw + HID2, :HID2]                        # (64, 64)
        cf_b = w_ref[rb:rb + 1, :HID2]                           # (1, 64)
        # comm_mask = ones - eye with an all-ones agent mask, so for every environment
        # mask^T @ hidden == per-env column-sum minus self (no MXU, no transpose).
        # Rows are grouped per environment: (chunk, 8, 64) sum over the agent axis.
        h3 = hidden.reshape(chunk, N_AGENTS, HID2)
        comm = (jnp.sum(h3, axis=1, keepdims=True) - h3).reshape(m_rows, HID2)
        # Build the fused K=64 input [comm | hidden] with a lane select (both halves
        # of each operand hold the full 32 features, so no concat/shift is needed).
        cf_in = jnp.where(comm_half, comm, hidden)               # (M, 64)
        hidden = jnp.tanh(
            x_enc
            + jnp.dot(cf_in, cf_w, preferred_element_type=jnp.float32)
            + cf_b)                                              # (M, 64), duplicated

    # ---- fused action + value heads, compact 8-lane output ----
    hv_w = w_ref[HV_W_OFF:HV_W_OFF + HID2, :]                    # (64, 128)
    hv_b = w_ref[HV_B_OFF:HV_B_OFF + 1, :]                       # (1, 128)
    hv = jnp.dot(hidden, hv_w, preferred_element_type=jnp.float32) + hv_b   # (M, 128)
    hv8 = hv[:, :OUT_W]        # lanes: [0:5] logits, [5] value, [6:8] exact zeros

    out_lane = jax.lax.broadcasted_iota(jnp.int32, (m_rows, OUT_W), 1)
    is_logit = out_lane < N_ACTIONS
    m = jnp.max(jnp.where(is_logit, hv8, -jnp.inf), axis=-1, keepdims=True)
    # mask non-logit lanes BEFORE exp so value/padding lanes can never overflow.
    shifted = jnp.where(is_logit, hv8 - m, jnp.float32(-1e30))
    e = jnp.exp(shifted)
    lse = m + jnp.log(jnp.sum(e, axis=-1, keepdims=True))
    # log_softmax applied only to the logit lanes; value / padding pass through.
    out_ref[...] = jnp.where(is_logit, hv8 - lse, hv8)


# ---------------- wrapper ----------------
@jax.jit
def commnet_forward(x, slab):
    """x: (B, N_AGENTS, OBS_DIM) f32; slab: (SLAB_ROWS, 128) packed params."""
    B = x.shape[0]
    # Cap the chunk so the grid keeps >= 2 steps whenever B >= 2 (v7x megacore: the
    # "parallel" axis must have at least one step per TensorCore to use both).
    chunk = max(1, min(CHUNK, -(-B // 2)))
    n_steps = pl.cdiv(B, chunk)
    b_pad = n_steps * chunk

    xf = x.reshape(B * N_AGENTS, OBS_DIM)
    if b_pad != B:
        # Pad whole environments (multiples of 8 rows) so padded envs never mix into
        # real envs' comm sums; padded outputs are sliced off below.
        xf = jnp.pad(xf, ((0, (b_pad - B) * N_AGENTS), (0, 0)))

    out = pl.pallas_call(
        functools.partial(commnet_kernel, chunk=chunk),
        out_shape=jax.ShapeDtypeStruct((b_pad * N_AGENTS, OUT_W), jnp.float32),
        grid=(n_steps,),
        in_specs=[
            pl.BlockSpec((chunk * N_AGENTS, OBS_DIM), lambda b: (b, 0)),
            pl.BlockSpec((SLAB_ROWS, SLAB_W), lambda b: (0, 0)),   # weights stay resident
        ],
        out_specs=pl.BlockSpec((chunk * N_AGENTS, OUT_W), lambda b: (b, 0)),
        compiler_params=pltpu.CompilerParams(
            dimension_semantics=("parallel",)),
    )(xf, slab)

    out = out[:B * N_AGENTS].reshape(B, N_AGENTS, OUT_W)
    action = out[..., :N_ACTIONS]                    # (B, N, n_actions) log-probs
    value = out[..., N_ACTIONS:N_ACTIONS + 1]        # (B, N, 1)         value head
    return action, value


# ---------------- parameter packing (wrapper-side constant folding) ----------------
def pack_params(params):
    (enc_w, enc_b, c_w, c_b, f_w, f_b, head_w, head_b, val_w, val_b) = params
    scale = (1.0 / (N_AGENTS - 1)) if (COMM_MODE_AVG and N_AGENTS > 1) else 1.0

    def dup(a):  # duplicate along the feature/output axis for the 64-lane activation layout
        return jnp.concatenate([a, a], axis=-1)

    slab = jnp.zeros((SLAB_ROWS, SLAB_W), jnp.float32)
    # encoder
    slab = slab.at[ENC_W_OFF:ENC_W_OFF + OBS_DIM, :HID2].set(dup(enc_w))
    slab = slab.at[ENC_B_OFF:ENC_B_OFF + 1, :HID2].set(dup(enc_b))
    # fused comm pass weights: rows = [scale*C_w ; f_w], columns duplicated; bias = C_b + f_b
    for i in range(COMM_PASSES):
        w = jnp.concatenate([c_w[i] * scale, f_w[i]], axis=0)        # (2*HID, HID)
        slab = slab.at[CF_W_OFF + i * HID2:CF_W_OFF + (i + 1) * HID2, :HID2].set(dup(w))
        b = c_b[i] + f_b[i]                                          # (1, HID)
        rb = CF_B_OFF + i * 8
        slab = slab.at[rb:rb + 1, :HID2].set(dup(b))
    # fused head/value weights; rows [HID:2*HID] are zero (duplicate half of hidden unused),
    # lanes [6:128] are zero (only the first OUT_W lanes of the dot are stored).
    hv_w = jnp.zeros((HID2, SLAB_W), jnp.float32)
    hv_w = hv_w.at[:HID, :N_ACTIONS].set(head_w)
    hv_w = hv_w.at[:HID, N_ACTIONS:N_ACTIONS + 1].set(val_w)
    slab = slab.at[HV_W_OFF:HV_W_OFF + HID2, :].set(hv_w)
    hv_b = jnp.zeros((1, SLAB_W), jnp.float32)
    hv_b = hv_b.at[:, :N_ACTIONS].set(head_b)
    hv_b = hv_b.at[:, N_ACTIONS:N_ACTIONS + 1].set(val_b)
    slab = slab.at[HV_B_OFF:HV_B_OFF + 1, :].set(hv_b)
    return slab


# ---------------- pure-JAX reference (faithful to the PyTorch forward) ----------------
def commnet_reference(x, params):
    (enc_w, enc_b, c_w, c_b, f_w, f_b, head_w, head_b, val_w, val_b) = params
    n = N_AGENTS
    comm_mask = jnp.ones((n, n), jnp.float32) - jnp.eye(n, dtype=jnp.float32)
    scale = (1.0 / (n - 1)) if (COMM_MODE_AVG and n > 1) else 1.0

    def one_env(xe):
        x_enc = jnp.tanh(xe @ enc_w + enc_b)
        hidden = x_enc
        for i in range(COMM_PASSES):
            # comm[i, j, :] = hidden[i, :] * comm_mask[i, j]; comm_sum = comm.sum(dim=0)
            comm = hidden[:, None, :] * comm_mask[:, :, None] * scale
            comm_sum = comm.sum(axis=0)
            c = comm_sum @ c_w[i] + c_b[i]
            fh = hidden @ f_w[i] + f_b[i]
            hidden = jnp.tanh(x_enc + fh + c)
        value = hidden @ val_w + val_b
        logits = hidden @ head_w + head_b
        return jax.nn.log_softmax(logits, axis=-1), value

    return jax.vmap(one_env)(x)


def make_params(key):
    ks = jax.random.split(key, 10)
    std = INIT_STD
    enc_w = std * jax.random.normal(ks[0], (OBS_DIM, HID), jnp.float32)
    enc_b = std * jax.random.normal(ks[1], (1, HID), jnp.float32)
    c_w = std * jax.random.normal(ks[2], (COMM_PASSES, HID, HID), jnp.float32)
    c_b = std * jax.random.normal(ks[3], (COMM_PASSES, 1, HID), jnp.float32)
    f_w = std * jax.random.normal(ks[4], (COMM_PASSES, HID, HID), jnp.float32)
    f_b = std * jax.random.normal(ks[5], (COMM_PASSES, 1, HID), jnp.float32)
    head_w = std * jax.random.normal(ks[6], (HID, N_ACTIONS), jnp.float32)
    head_b = std * jax.random.normal(ks[7], (1, N_ACTIONS), jnp.float32)
    val_w = std * jax.random.normal(ks[8], (HID, 1), jnp.float32)
    val_b = std * jax.random.normal(ks[9], (1, 1), jnp.float32)
    return (enc_w, enc_b, c_w, c_b, f_w, f_b, head_w, head_b, val_w, val_b)


if __name__ == "__main__":
    key = jax.random.PRNGKey(0)
    k_x, k_p = jax.random.split(key)
    B = 64  # 64 envs -> 2 grid steps of CHUNK=32 envs (256 MXU rows each; both v7x TCs busy)
    x = jax.random.normal(k_x, (B, N_AGENTS, OBS_DIM), jnp.float32)
    params = make_params(k_p)
    slab = pack_params(params)

    action, value = commnet_forward(x, slab)
    jax.block_until_ready((action, value))

    ref_action, ref_value = commnet_reference(x, params)
    assert action.shape == (B, N_AGENTS, N_ACTIONS)
    assert value.shape == (B, N_AGENTS, 1)
    # Tolerance covers the reordered accumulation / scale-folding of the fused kernel at
    # the TPU's default matmul precision (bf16 MXU passes); set Precision.HIGHEST on the
    # kernel dots (see TODO at top) if tighter agreement is required.
    assert jnp.allclose(action, ref_action, atol=1e-2, rtol=1e-2)
    assert jnp.allclose(value, ref_value, atol=1e-2, rtol=1e-2)

    print("KERNEL_OK")
</pallas_src>

<mosaic_0001>
module attributes {stable_mosaic.version = 11 : i64} {
  func.func @commnet_kernel(%arg0: i32, %arg1: memref<256x16xf32, #tpu.memory_space<vmem>>, %arg2: memref<240x128xf32, #tpu.memory_space<vmem>>, %arg3: memref<256x8xf32, #tpu.memory_space<vmem>>) attributes {dimension_semantics = [#tpu.dimension_semantics<parallel>], iteration_bounds = array<i64: 2>, scalar_prefetch = 0 : i64, scratch_operands = 0 : i64, tpu.core_type = #tpu.core_type<tc>, window_params = [{transform_indices = @transform_0, window_bounds = array<i64: 256, 16>}, {pipeline_mode = #tpu.pipeline_mode<synchronous>, transform_indices = @transform_1, window_bounds = array<i64: 240, 128>}, {transform_indices = @transform_2, window_bounds = array<i64: 256, 8>}]} {
    %c0 = arith.constant 0 : index
    %c0_0 = arith.constant 0 : index
    %0 = vector.load %arg1[%c0, %c0_0] : memref<256x16xf32, #tpu.memory_space<vmem>>, vector<256x16xf32>
    %c0_1 = arith.constant 0 : index
    %c0_2 = arith.constant 0 : index
    %1 = vector.load %arg2[%c0_1, %c0_2] : memref<240x128xf32, #tpu.memory_space<vmem>>, vector<16x64xf32>
    %c16 = arith.constant 16 : index
    %c0_3 = arith.constant 0 : index
    %2 = vector.load %arg2[%c16, %c0_3] : memref<240x128xf32, #tpu.memory_space<vmem>>, vector<1x64xf32>
    %cst = arith.constant dense<0.000000e+00> : vector<256x64xf32>
    %3 = tpu.matmul %0, %1, %cst {dimension_numbers = #tpu.dot_dimension_numbers<[1], [0], [0], [1], [0, 0, 1, 1], [], []>} : vector<256x16xf32>, vector<16x64xf32>, vector<256x64xf32> -> vector<256x64xf32>
    %4 = vector.broadcast %2 : vector<1x64xf32> to vector<256x64xf32>
    %5 = arith.addf %3, %4 : vector<256x64xf32>
    %6 = math.tanh %5 : vector<256x64xf32>
    %7 = tpu.iota {dimensions = array<i32: 1>} : vector<256x64xi32>
    %c32_i32 = arith.constant 32 : i32
    %8 = vector.broadcast %c32_i32 : i32 to vector<256x64xi32>
    %9 = arith.cmpi slt, %7, %8 : vector<256x64xi32>
    %c24 = arith.constant 24 : index
    %c0_4 = arith.constant 0 : index
    %10 = vector.load %arg2[%c24, %c0_4] : memref<240x128xf32, #tpu.memory_space<vmem>>, vector<64x64xf32>
    %c152 = arith.constant 152 : index
    %c0_5 = arith.constant 0 : index
    %11 = vector.load %arg2[%c152, %c0_5] : memref<240x128xf32, #tpu.memory_space<vmem>>, vector<1x64xf32>
    %12 = vector.shape_cast %6 : vector<256x64xf32> to vector<32x8x64xf32>
    %cst_6 = arith.constant dense<0.000000e+00> : vector<32x64xf32>
    %13 = vector.multi_reduction <add>, %12, %cst_6 [1] : vector<32x8x64xf32> to vector<32x64xf32>
    %14 = vector.shape_cast %13 : vector<32x64xf32> to vector<32x1x64xf32>
    %15 = vector.broadcast %14 : vector<32x1x64xf32> to vector<32x8x64xf32>
    %16 = arith.subf %15, %12 : vector<32x8x64xf32>
    %17 = vector.shape_cast %16 : vector<32x8x64xf32> to vector<256x64xf32>
    %18 = arith.select %9, %17, %6 : vector<256x64xi1>, vector<256x64xf32>
    %cst_7 = arith.constant dense<0.000000e+00> : vector<256x64xf32>
    %19 = tpu.matmul %18, %10, %cst_7 {dimension_numbers = #tpu.dot_dimension_numbers<[1], [0], [0], [1], [0, 0, 1, 1], [], []>} : vector<256x64xf32>, vector<64x64xf32>, vector<256x64xf32> -> vector<256x64xf32>
    %20 = arith.addf %6, %19 : vector<256x64xf32>
    %21 = vector.broadcast %11 : vector<1x64xf32> to vector<256x64xf32>
    %22 = arith.addf %20, %21 : vector<256x64xf32>
    %23 = math.tanh %22 : vector<256x64xf32>
    %c88 = arith.constant 88 : index
    %c0_8 = arith.constant 0 : index
    %24 = vector.load %arg2[%c88, %c0_8] : memref<240x128xf32, #tpu.memory_space<vmem>>, vector<64x64xf32>
    %c160 = arith.constant 160 : index
    %c0_9 = arith.constant 0 : index
    %25 = vector.load %arg2[%c160, %c0_9] : memref<240x128xf32, #tpu.memory_space<vmem>>, vector<1x64xf32>
    %26 = vector.shape_cast %23 : vector<256x64xf32> to vector<32x8x64xf32>
    %cst_10 = arith.constant dense<0.000000e+00> : vector<32x64xf32>
    %27 = vector.multi_reduction <add>, %26, %cst_10 [1] : vector<32x8x64xf32> to vector<32x64xf32>
    %28 = vector.shape_cast %27 : vector<32x64xf32> to vector<32x1x64xf32>
    %29 = vector.broadcast %28 : vector<32x1x64xf32> to vector<32x8x64xf32>
    %30 = arith.subf %29, %26 : vector<32x8x64xf32>
    %31 = vector.shape_cast %30 : vector<32x8x64xf32> to vector<256x64xf32>
    %32 = arith.select %9, %31, %23 : vector<256x64xi1>, vector<256x64xf32>
    %cst_11 = arith.constant dense<0.000000e+00> : vector<256x64xf32>
    %33 = tpu.matmul %32, %24, %cst_11 {dimension_numbers = #tpu.dot_dimension_numbers<[1], [0], [0], [1], [0, 0, 1, 1], [], []>} : vector<256x64xf32>, vector<64x64xf32>, vector<256x64xf32> -> vector<256x64xf32>
    %34 = arith.addf %6, %33 : vector<256x64xf32>
    %35 = vector.broadcast %25 : vector<1x64xf32> to vector<256x64xf32>
    %36 = arith.addf %34, %35 : vector<256x64xf32>
    %37 = math.tanh %36 : vector<256x64xf32>
    %c168 = arith.constant 168 : index
    %c0_12 = arith.constant 0 : index
    %38 = vector.load %arg2[%c168, %c0_12] : memref<240x128xf32, #tpu.memory_space<vmem>>, vector<64x128xf32>
    %c232 = arith.constant 232 : index
    %c0_13 = arith.constant 0 : index
    %39 = vector.load %arg2[%c232, %c0_13] : memref<240x128xf32, #tpu.memory_space<vmem>>, vector<1x128xf32>
    %cst_14 = arith.constant dense<0.000000e+00> : vector<256x128xf32>
    %40 = tpu.matmul %37, %38, %cst_14 {dimension_numbers = #tpu.dot_dimension_numbers<[1], [0], [0], [1], [0, 0, 1, 1], [], []>} : vector<256x64xf32>, vector<64x128xf32>, vector<256x128xf32> -> vector<256x128xf32>
    %41 = vector.broadcast %39 : vector<1x128xf32> to vector<256x128xf32>
    %42 = arith.addf %40, %41 : vector<256x128xf32>
    %43 = vector.extract_strided_slice %42 {offsets = [0, 0], sizes = [256, 8], strides = [1, 1]} : vector<256x128xf32> to vector<256x8xf32>
    %44 = tpu.iota {dimensions = array<i32: 1>} : vector<256x8xi32>
    %c5_i32 = arith.constant 5 : i32
    %45 = vector.broadcast %c5_i32 : i32 to vector<256x8xi32>
    %46 = arith.cmpi slt, %44, %45 : vector<256x8xi32>
    %cst_15 = arith.constant 0xFF800000 : f32
    %47 = vector.broadcast %cst_15 : f32 to vector<256x8xf32>
    %48 = arith.select %46, %43, %47 : vector<256x8xi1>, vector<256x8xf32>
    %cst_16 = arith.constant dense<0xFF800000> : vector<256xf32>
    %49 = vector.multi_reduction <maximumf>, %48, %cst_16 [1] : vector<256x8xf32> to vector<256xf32>
    %50 = vector.shape_cast %49 : vector<256xf32> to vector<256x1xf32>
    %51 = vector.broadcast %50 : vector<256x1xf32> to vector<256x8xf32>
    %52 = arith.subf %43, %51 : vector<256x8xf32>
    %cst_17 = arith.constant -1.000000e+30 : f32
    %53 = vector.broadcast %cst_17 : f32 to vector<256x8xf32>
    %54 = arith.select %46, %52, %53 : vector<256x8xi1>, vector<256x8xf32>
    %55 = math.exp %54 : vector<256x8xf32>
    %cst_18 = arith.constant dense<0.000000e+00> : vector<256xf32>
    %56 = vector.multi_reduction <add>, %55, %cst_18 [1] : vector<256x8xf32> to vector<256xf32>
    %57 = vector.shape_cast %56 : vector<256xf32> to vector<256x1xf32>
    %58 = math.log %57 : vector<256x1xf32>
    %59 = arith.addf %50, %58 : vector<256x1xf32>
    %60 = vector.broadcast %59 : vector<256x1xf32> to vector<256x8xf32>
    %61 = arith.subf %43, %60 : vector<256x8xf32>
    %62 = arith.select %46, %61, %43 : vector<256x8xi1>, vector<256x8xf32>
    %c0_19 = arith.constant 0 : index
    %c0_20 = arith.constant 0 : index
    %63 = vector.load %arg3[%c0_19, %c0_20] : memref<256x8xf32, #tpu.memory_space<vmem>>, vector<256x8xf32>
    tpu.vector_store %arg3[%c0_19, %c0_20], %62 {strides = array<i32>} : memref<256x8xf32, #tpu.memory_space<vmem>>, vector<256x8xf32>,
    return
  }
  func.func @transform_0(%arg0: i32) -> (i32, i32) {
    %c0_i32 = arith.constant 0 : i32
    %c0_i32_0 = arith.constant 0 : i32
    return %arg0, %c0_i32 : i32, i32
  }
  func.func @transform_1(%arg0: i32) -> (i32, i32) {
    %c0_i32 = arith.constant 0 : i32
    %c0_i32_0 = arith.constant 0 : i32
    %c0_i32_1 = arith.constant 0 : i32
    return %c0_i32, %c0_i32_0 : i32, i32
  }
  func.func @transform_2(%arg0: i32) -> (i32, i32) {
    %c0_i32 = arith.constant 0 : i32
    %c0_i32_0 = arith.constant 0 : i32
    return %arg0, %c0_i32 : i32, i32
  }
}

</mosaic_0001>

<llo_original>
// kernel: commnet_forward.1
$region0: #{commnet_forward.1}
  #allocation0 [shape = 'u32[]', space=smem, size = 0x4, offset = 0x4, fixed_abs, tag = 'smem constant byte address 0x4 - core index']
  #allocation1 [shape = 'u32[72,128]{1,0:T(1,128)}', space=vmem, size = 0x9000, scoped, tag = 'internal scratch']
  %s0 = inlined_call_operand.vmem [shape: f32[512,16], index: 0, kind: input, shape index: {}]
  %s1 = inlined_call_operand.vmem [shape: f32[240,128], index: 1, kind: input, shape index: {}]
  %s2 = inlined_call_operand.vmem [shape: f32[512,8], index: 2, kind: output, shape index: {}]
  %s3 = sld [smem:[#allocation0]]
  $region41: #{commnet_forward.1} parent=0
    _
  %s5 = ssub.s32 1, %s3
  %s6 = scalar_select 0, %s5, %s3
  loop: start=0, step=1, limit=4
  $region2: #{commnet_forward.1} parent=0 // loop_pre_header
    _
  $region3: #{commnet_forward.1} parent=0 // loop_header
    %s8 = sphi 0, %s12
    %p9 = scmp.ge.s32.totalorder %s8, 4
    %s18 = sphi 0, %s20
    %s21 = sphi 0, %s18
    %s22 = sphi 0, %s21
    %s38 = sphi 0, %s22
    %s42 = sphi 0, %s42
    %s44 = sphi 0, %s42
    %s45 = sphi 0, %s44
    %s59 = sphi 0, %s45
    %s65 = sphi 0, %s67
    %s68 = sphi 0, %s65
    %s69 = sphi 0, %s68
    %s85 = sphi 0, %s69
  $region4: #{commnet_forward.1} parent=0 // loop_header_branch
    %11 = sbr.rel (%p9) target = $region8
  $region5: #{commnet_forward.1} parent=0 // loop_body
    %s13 = ssub.s32 %s8, 1
    %s14 = ssub.s32 %s8, 2
    %s15 = sadd.s32 %s8, 1
    %s16 = ssub.s32 %s8, %s15
    %p17 = scmp.eq.s32.totalorder %s16, 0
    %s19 = sadd.s32 %s18, 1
    %s20 = scalar_select %p17, %s18, %s19
    %p23 = pneg %p17
    %p24 = scmp.eq.s32.totalorder %s8, 1
    %p25 = por %p23, %p24
    %p26 = scmp.ne.s32.totalorder %s18, %s21
    %p27 = scmp.eq.s32.totalorder %s8, 0
    %p28 = por %p26, %p27
    %p29 = scmp.ne.s32.totalorder %s18, %s21
    %p30 = scmp.eq.s32.totalorder %s13, 1
    %p31 = por %p29, %p30
    %p32 = scmp.ne.s32.totalorder %s21, %s22
    %p33 = scmp.eq.s32.totalorder %s13, 0
    %p34 = por %p32, %p33
    %p35 = scmp.ne.s32.totalorder %s21, %s22
    %p36 = scmp.eq.s32.totalorder %s14, 1
    %p37 = por %p35, %p36
    %p39 = scmp.ne.s32.totalorder %s22, %s38
    %p40 = scmp.eq.s32.totalorder %s14, 0
    %p41 = por %p39, %p40
    %s43 = sadd.s32 %s42, 1
    %p46 = scmp.eq.s32.totalorder %s8, 1
    %p47 = scmp.ne.s32.totalorder %s42, %s44
    %p48 = scmp.eq.s32.totalorder %s8, 0
    %p49 = por %p47, %p48
    %p50 = scmp.ne.s32.totalorder %s42, %s44
    %p51 = scmp.eq.s32.totalorder %s13, 1
    %p52 = por %p50, %p51
    %p53 = scmp.ne.s32.totalorder %s44, %s45
    %p54 = scmp.eq.s32.totalorder %s13, 0
    %p55 = por %p53, %p54
    %p56 = scmp.ne.s32.totalorder %s44, %s45
    %p57 = scmp.eq.s32.totalorder %s14, 1
    %p58 = por %p56, %p57
    %p60 = scmp.ne.s32.totalorder %s45, %s59
    %p61 = scmp.eq.s32.totalorder %s14, 0
    %p62 = por %p60, %p61
    %s63 = ssub.s32 %s8, %s15
    %p64 = scmp.eq.s32.totalorder %s63, 0
    %s66 = sadd.s32 %s65, 1
    %s67 = scalar_select %p64, %s65, %s66
    %p70 = pneg %p64
    %p71 = scmp.eq.s32.totalorder %s8, 1
    %p72 = por %p70, %p71
    %p73 = scmp.ne.s32.totalorder %s65, %s68
    %p74 = scmp.eq.s32.totalorder %s8, 0
    %p75 = por %p73, %p74
    %p76 = scmp.ne.s32.totalorder %s65, %s68
    %p77 = scmp.eq.s32.totalorder %s13, 1
    %p78 = por %p76, %p77
    %p79 = scmp.ne.s32.totalorder %s68, %s69
    %p80 = scmp.eq.s32.totalorder %s13, 0
    %p81 = por %p79, %p80
    %p82 = scmp.ne.s32.totalorder %s68, %s69
    %p83 = scmp.eq.s32.totalorder %s14, 1
    %p84 = por %p82, %p83
    %p86 = scmp.ne.s32.totalorder %s69, %s85
    %p87 = scmp.eq.s32.totalorder %s14, 0
    %p88 = por %p86, %p87
    %p89 = scmp.le.s32.totalorder 1, %s8
    %p90 = scmp.lt.s32.totalorder %s8, 3
    %p91 = pnand %p89, %p90
    %p92 = pneg %p91
    // Predicated region
    $region9: #{commnet_forward.1} parent=5 // pred_check
      _
    $region10: #{commnet_forward.1} parent=5 // pred_check_branch
      %94 = sbr.rel (%p91) target = $region12
    $region11: #{commnet_forward.1} parent=5 // pred_region
      %s95 = ssub.s32 %s8, 1
      // Predicated region
      $region13: #{commnet_forward.1} parent=11 // pred_check
        %p96 = pneg %p55
      $region14: #{commnet_forward.1} parent=11 // pred_check_branch
        %98 = sbr.rel (%p96) target = $region16
      $region15: #{commnet_forward.1} parent=11 // pred_region
        _
      $region16: #{commnet_forward.1} parent=11 // pred_fallthru
        _
    $region12: #{commnet_forward.1} parent=5 // pred_fallthru
      _
    %p99 = scmp.lt.s32.totalorder %s8, 2
    // Predicated region
    $region17: #{commnet_forward.1} parent=5 // pred_check
      %p100 = pneg %p99
    $region18: #{commnet_forward.1} parent=5 // pred_check_branch
      %102 = sbr.rel (%p100) target = $region20
    $region19: #{commnet_forward.1} parent=5 // pred_region
      // Predicated region
      $region21: #{commnet_forward.1} parent=19 // pred_check
        %p103 = pneg %p28
      $region22: #{commnet_forward.1} parent=19 // pred_check_branch
        %105 = sbr.rel (%p103) target = $region24
      $region23: #{commnet_forward.1} parent=19 // pred_region
        %s106 = smul.u32 32, %s8
        %p107 = scmp.lt.s32.totalorder %s106, 63
        %s108 = scalar_select %p107, %s106, 63
        %s109 = smul.addr %s108, 8
        %s110 = scalar_lea.vmem %s0, %s109
        %s111 = smul.u32 32, %s8
      $region24: #{commnet_forward.1} parent=19 // pred_fallthru
        _
    $region20: #{commnet_forward.1} parent=5 // pred_fallthru
      _
    %p112 = scmp.le.s32.totalorder 1, %s8
    %p113 = scmp.lt.s32.totalorder %s8, 3
    %p114 = pnand %p112, %p113
    %p115 = pneg %p114
    // Predicated region
    $region25: #{commnet_forward.1} parent=5 // pred_check
      _
    $region26: #{commnet_forward.1} parent=5 // pred_check_branch
      %117 = sbr.rel (%p114) target = $region28
    $region27: #{commnet_forward.1} parent=5 // pred_region
      %s118 = ssub.s32 %s8, 1
      %s119 = smul.u32 32, %s13
      %p120 = scmp.lt.s32.totalorder %s119, 63
      %s121 = scalar_select %p120, %s119, 63
      %s122 = smul.addr %s121, 8
      %s123 = scalar_lea.vmem %s0, %s122
      %p124 = pneg %p34
      %p125 = pneg %p31
      %p126 = pneg %p55
      %p127 = pneg %p52
      %p128 = pneg %p81
      %p129 = pneg %p78
      %s130 = smul.u32 32, %s13
      %p131 = scmp.lt.s32.totalorder %s130, 63
      %s132 = scalar_select %p131, %s130, 63
      %s133 = smul.addr %s132, 8
      %s134 = scalar_lea.vmem %s2, %s133
      %s135 = smul.u32 32, %s13
      %p136 = scmp.lt.s32.totalorder %s135, 63
      %s137 = scalar_select %p136, %s135, 63
      %s138 = smul.addr %s137, 8
      %s139 = scalar_lea.vmem %s0, %s138
      %s140 = smul.u32 32, %s13
      %s141 = smul.u32 32, %s13
      %p142 = scmp.lt.s32.totalorder %s141, 63
      %s143 = scalar_select %p142, %s141, 63
      %s144 = smul.addr %s143, 8
      %s145 = scalar_lea.vmem %s2, %s144
      %s146 = smul.u32 32, %s13
      %v147 = vld [vmem:[%s139] sm:$0xff]
      %v148 = vld [vmem:[%s139 + $0x8] sm:$0xff]
      %v149 = vld [vmem:[%s139 + $0x10] sm:$0xff]
      %v150 = vld [vmem:[%s139 + $0x18] sm:$0xff]
      %v151 = vld [vmem:[%s139 + $0x20] sm:$0xff]
      %v152 = vld [vmem:[%s139 + $0x28] sm:$0xff]
      %v153 = vld [vmem:[%s139 + $0x30] sm:$0xff]
      %v154 = vld [vmem:[%s139 + $0x38] sm:$0xff]
      %v155 = vld [vmem:[%s139 + $0x40] sm:$0xff]
      %v156 = vld [vmem:[%s139 + $0x48] sm:$0xff]
      %v157 = vld [vmem:[%s139 + $0x50] sm:$0xff]
      %v158 = vld [vmem:[%s139 + $0x58] sm:$0xff]
      %v159 = vld [vmem:[%s139 + $0x60] sm:$0xff]
      %v160 = vld [vmem:[%s139 + $0x68] sm:$0xff]
      %v161 = vld [vmem:[%s139 + $0x70] sm:$0xff]
      %v162 = vld [vmem:[%s139 + $0x78] sm:$0xff]
      %v163 = vld [vmem:[%s139 + $0x80] sm:$0xff]
      %v164 = vld [vmem:[%s139 + $0x88] sm:$0xff]
      %v165 = vld [vmem:[%s139 + $0x90] sm:$0xff]
      %v166 = vld [vmem:[%s139 + $0x98] sm:$0xff]
      %v167 = vld [vmem:[%s139 + $0xa0] sm:$0xff]
      %v168 = vld [vmem:[%s139 + $0xa8] sm:$0xff]
      %v169 = vld [vmem:[%s139 + $0xb0] sm:$0xff]
      %v170 = vld [vmem:[%s139 + $0xb8] sm:$0xff]
      %v171 = vld [vmem:[%s139 + $0xc0] sm:$0xff]
      %v172 = vld [vmem:[%s139 + $0xc8] sm:$0xff]
      %v173 = vld [vmem:[%s139 + $0xd0] sm:$0xff]
      %v174 = vld [vmem:[%s139 + $0xd8] sm:$0xff]
      %v175 = vld [vmem:[%s139 + $0xe0] sm:$0xff]
      %v176 = vld [vmem:[%s139 + $0xe8] sm:$0xff]
      %v177 = vld [vmem:[%s139 + $0xf0] sm:$0xff]
      %v178 = vld [vmem:[%s139 + $0xf8] sm:$0xff]
      %v179 = vld [vmem:[%s1] sm:$0xff]
      %v180 = vld [vmem:[%s1 + $0x8] sm:$0xff]
      %v181 = vld [vmem:[%s1 + $0x10] sm:$0x1]
      %v182 = vperm.slane %v181, 0
      %vm183 = vcmask 130048
      %v185 = vsel %vm183, %v147, 0
      %v188 = vsel %vm183, %v148, 0
      %v191 = vsel %vm183, %v149, 0
      %v194 = vsel %vm183, %v150, 0
      %v197 = vsel %vm183, %v151, 0
      %v200 = vsel %vm183, %v152, 0
      %v203 = vsel %vm183, %v153, 0
      %v206 = vsel %vm183, %v154, 0
      %v209 = vsel %vm183, %v155, 0
      %v212 = vsel %vm183, %v156, 0
      %v215 = vsel %vm183, %v157, 0
      %v218 = vsel %vm183, %v158, 0
      %v221 = vsel %vm183, %v159, 0
      %v224 = vsel %vm183, %v160, 0
      %v227 = vsel %vm183, %v161, 0
      %v230 = vsel %vm183, %v162, 0
      %v233 = vsel %vm183, %v163, 0
      %v236 = vsel %vm183, %v164, 0
      %v239 = vsel %vm183, %v165, 0
      %v242 = vsel %vm183, %v166, 0
      %v245 = vsel %vm183, %v167, 0
      %v248 = vsel %vm183, %v168, 0
      %v251 = vsel %vm183, %v169, 0
      %v254 = vsel %vm183, %v170, 0
      %v257 = vsel %vm183, %v171, 0
      %v260 = vsel %vm183, %v172, 0
      %v263 = vsel %vm183, %v173, 0
      %v266 = vsel %vm183, %v174, 0
      %v269 = vsel %vm183, %v175, 0
      %v272 = vsel %vm183, %v176, 0
      %v275 = vsel %vm183, %v177, 0
      %v278 = vsel %vm183, %v178, 0
      %280 = vmatpush.msra.mxu0 0.0
      %281 = vmatpush.msra.mxu0 0.0
      %282 = vmatpush.msra.mxu0 0.0
      %283 = vmatpush.msra.mxu0 0.0
      %284 = vmatpush.msra.mxu0 0.0
      %285 = vmatpush.msra.mxu0 0.0
      %286 = vmatpush.msra.mxu0 0.0
      %287 = vmatpush.msra.mxu0 0.0
      %288 = vmatpush.msra.mxu0 0.0
      %289 = vmatpush.msra.mxu0 0.0
      %290 = vmatpush.msra.mxu0 0.0
      %291 = vmatpush.msra.mxu0 0.0
      %292 = vmatpush.msra.mxu0 0.0
      %293 = vmatpush.msra.mxu0 0.0
      %294 = vmatpush.msra.mxu0 %v180
      %295 = vmatpush.msra.mxu0 %v179
      %296 = vmatmul.f32.gmra.mxu0 %v185
      %v297 = vpop.f32.mrf.mxu0
      %v298 = vadd.f32 %v182, %v297
      %299 = vmatmul.f32.gmra.mxu0 %v188
      %v300 = vpop.f32.mrf.mxu0
      %v301 = vadd.f32 %v182, %v300
      %302 = vmatmul.f32.gmra.mxu0 %v191
      %v303 = vpop.f32.mrf.mxu0
      %v304 = vadd.f32 %v182, %v303
      %305 = vmatmul.f32.gmra.mxu0 %v194
      %v306 = vpop.f32.mrf.mxu0
      %v307 = vadd.f32 %v182, %v306
      %308 = vmatmul.f32.gmra.mxu0 %v197
      %v309 = vpop.f32.mrf.mxu0
      %v310 = vadd.f32 %v182, %v309
      %311 = vmatmul.f32.gmra.mxu0 %v200
      %v312 = vpop.f32.mrf.mxu0
      %v313 = vadd.f32 %v182, %v312
      %314 = vmatmul.f32.gmra.mxu0 %v203
      %v315 = vpop.f32.mrf.mxu0
      %v316 = vadd.f32 %v182, %v315
      %317 = vmatmul.f32.gmra.mxu0 %v206
      %v318 = vpop.f32.mrf.mxu0
      %v319 = vadd.f32 %v182, %v318
      %320 = vmatmul.f32.gmra.mxu0 %v209
      %v321 = vpop.f32.mrf.mxu0
      %v322 = vadd.f32 %v182, %v321
      %323 = vmatmul.f32.gmra.mxu0 %v212
      %v324 = vpop.f32.mrf.mxu0
      %v325 = vadd.f32 %v182, %v324
      %326 = vmatmul.f32.gmra.mxu0 %v215
      %v327 = vpop.f32.mrf.mxu0
      %v328 = vadd.f32 %v182, %v327
      %329 = vmatmul.f32.gmra.mxu0 %v218
      %v330 = vpop.f32.mrf.mxu0
      %v331 = vadd.f32 %v182, %v330
      %332 = vmatmul.f32.gmra.mxu0 %v221
      %v333 = vpop.f32.mrf.mxu0
      %v334 = vadd.f32 %v182, %v333
      %335 = vmatmul.f32.gmra.mxu0 %v224
      %v336 = vpop.f32.mrf.mxu0
      %v337 = vadd.f32 %v182, %v336
      %338 = vmatmul.f32.gmra.mxu0 %v227
      %v339 = vpop.f32.mrf.mxu0
      %v340 = vadd.f32 %v182, %v339
      %341 = vmatmul.f32.gmra.mxu0 %v230
      %v342 = vpop.f32.mrf.mxu0
      %v343 = vadd.f32 %v182, %v342
      %344 = vmatmul.f32.gmra.mxu0 %v233
      %v345 = vpop.f32.mrf.mxu0
      %v346 = vadd.f32 %v182, %v345
      %347 = vmatmul.f32.gmra.mxu0 %v236
      %v348 = vpop.f32.mrf.mxu0
      %v349 = vadd.f32 %v182, %v348
      %350 = vmatmul.f32.gmra.mxu0 %v239
      %v351 = vpop.f32.mrf.mxu0
      %v352 = vadd.f32 %v182, %v351
      %353 = vmatmul.f32.gmra.mxu0 %v242
      %v354 = vpop.f32.mrf.mxu0
      %v355 = vadd.f32 %v182, %v354
      %356 = vmatmul.f32.gmra.mxu0 %v245
      %v357 = vpop.f32.mrf.mxu0
      %v358 = vadd.f32 %v182, %v357
      %359 = vmatmul.f32.gmra.mxu0 %v248
      %v360 = vpop.f32.mrf.mxu0
      %v361 = vadd.f32 %v182, %v360
      %362 = vmatmul.f32.gmra.mxu0 %v251
      %v363 = vpop.f32.mrf.mxu0
      %v364 = vadd.f32 %v182, %v363
      %365 = vmatmul.f32.gmra.mxu0 %v254
      %v366 = vpop.f32.mrf.mxu0
      %v367 = vadd.f32 %v182, %v366
      %368 = vmatmul.f32.gmra.mxu0 %v257
      %v369 = vpop.f32.mrf.mxu0
      %v370 = vadd.f32 %v182, %v369
      %371 = vmatmul.f32.gmra.mxu0 %v260
      %v372 = vpop.f32.mrf.mxu0
      %v373 = vadd.f32 %v182, %v372
      %374 = vmatmul.f32.gmra.mxu0 %v263
      %v375 = vpop.f32.mrf.mxu0
      %v376 = vadd.f32 %v182, %v375
      %377 = vmatmul.f32.gmra.mxu0 %v266
      %v378 = vpop.f32.mrf.mxu0
      %v379 = vadd.f32 %v182, %v378
      %380 = vmatmul.f32.gmra.mxu0 %v269
      %v381 = vpop.f32.mrf.mxu0
      %v382 = vadd.f32 %v182, %v381
      %383 = vmatmul.f32.gmra.mxu0 %v272
      %v384 = vpop.f32.mrf.mxu0
      %v385 = vadd.f32 %v182, %v384
      %386 = vmatmul.f32.gmra.mxu0 %v275
      %v387 = vpop.f32.mrf.mxu0
      %v388 = vadd.f32 %v182, %v387
      %389 = vmatmul.f32.gmra.mxu0 %v278
      %v390 = vpop.f32.mrf.mxu0
      %v391 = vadd.f32 %v182, %v390
      %392 = vdwg.mxu0
      %v393 = vtanh.pop %v298
      %v394 = vtanh.pop %v301
      %v395 = vtanh.pop %v304
      %v396 = vtanh.pop %v307
      %v397 = vtanh.pop %v310
      %v398 = vtanh.pop %v313
      %v399 = vtanh.pop %v316
      %v400 = vtanh.pop %v319
      %v401 = vtanh.pop %v322
      %v402 = vtanh.pop %v325
      %v403 = vtanh.pop %v328
      %v404 = vtanh.pop %v331
      %v405 = vtanh.pop %v334
      %v406 = vtanh.pop %v337
      %v407 = vtanh.pop %v340
      %v408 = vtanh.pop %v343
      %v409 = vtanh.pop %v346
      %v410 = vtanh.pop %v349
      %v411 = vtanh.pop %v352
      %v412 = vtanh.pop %v355
      %v413 = vtanh.pop %v358
      %v414 = vtanh.pop %v361
      %v415 = vtanh.pop %v364
      %v416 = vtanh.pop %v367
      %v417 = vtanh.pop %v370
      %v418 = vtanh.pop %v373
      %v419 = vtanh.pop %v376
      %v420 = vtanh.pop %v379
      %v421 = vtanh.pop %v382
      %v422 = vtanh.pop %v385
      %v423 = vtanh.pop %v388
      %v424 = vtanh.pop %v391
      %v425 = vlaneseq
      %v426 = vand.u32 %v425, 127
      %vm427 = vcmp.lt.s32.totalorder %v426, 32
      %v428 = vld [vmem:[%s1 + $0x18] sm:$0xff]
      %v429 = vld [vmem:[%s1 + $0x20] sm:$0xff]
      %v430 = vld [vmem:[%s1 + $0x28] sm:$0xff]
      %v431 = vld [vmem:[%s1 + $0x30] sm:$0xff]
      %v432 = vld [vmem:[%s1 + $0x38] sm:$0xff]
      %v433 = vld [vmem:[%s1 + $0x40] sm:$0xff]
      %v434 = vld [vmem:[%s1 + $0x48] sm:$0xff]
      %v435 = vld [vmem:[%s1 + $0x50] sm:$0xff]
      %v436 = vld [vmem:[%s1 + $0x98] sm:$0x1]
      %vm437 = vcmask 523264
      %v438 = vsel %vm437, %v393, 0.0
      %v439 = vrot.slane %v438, 4
      %v440 = vadd.f32 %v438, %v439
      %v441 = vrot.slane %v440, 2
      %v442 = vadd.f32 %v440, %v441
      %v443 = vrot.slane %v442, 1
      %v444 = vadd.f32 %v442, %v443
      %v445 = vsel %vm437, %v394, 0.0
      %v446 = vrot.slane %v445, 4
      %v447 = vadd.f32 %v445, %v446
      %v448 = vrot.slane %v447, 2
      %v449 = vadd.f32 %v447, %v448
      %v450 = vrot.slane %v449, 1
      %v451 = vadd.f32 %v449, %v450
      %v452 = vsel %vm437, %v395, 0.0
      %v453 = vrot.slane %v452, 4
      %v454 = vadd.f32 %v452, %v453
      %v455 = vrot.slane %v454, 2
      %v456 = vadd.f32 %v454, %v455
      %v457 = vrot.slane %v456, 1
      %v458 = vadd.f32 %v456, %v457
      %v459 = vsel %vm437, %v396, 0.0
      %v460 = vrot.slane %v459, 4
      %v461 = vadd.f32 %v459, %v460
      %v462 = vrot.slane %v461, 2
      %v463 = vadd.f32 %v461, %v462
      %v464 = vrot.slane %v463, 1
      %v465 = vadd.f32 %v463, %v464
      %v466 = vsel %vm437, %v397, 0.0
      %v467 = vrot.slane %v466, 4
      %v468 = vadd.f32 %v466, %v467
      %v469 = vrot.slane %v468, 2
      %v470 = vadd.f32 %v468, %v469
      %v471 = vrot.slane %v470, 1
      %v472 = vadd.f32 %v470, %v471
      %v473 = vsel %vm437, %v398, 0.0
      %v474 = vrot.slane %v473, 4
      %v475 = vadd.f32 %v473, %v474
      %v476 = vrot.slane %v475, 2
      %v477 = vadd.f32 %v475, %v476
      %v478 = vrot.slane %v477, 1
      %v479 = vadd.f32 %v477, %v478
      %v480 = vsel %vm437, %v399, 0.0
      %v481 = vrot.slane %v480, 4
      %v482 = vadd.f32 %v480, %v481
      %v483 = vrot.slane %v482, 2
      %v484 = vadd.f32 %v482, %v483
      %v485 = vrot.slane %v484, 1
      %v486 = vadd.f32 %v484, %v485
      %v487 = vsel %vm437, %v400, 0.0
      %v488 = vrot.slane %v487, 4
      %v489 = vadd.f32 %v487, %v488
      %v490 = vrot.slane %v489, 2
      %v491 = vadd.f32 %v489, %v490
      %v492 = vrot.slane %v491, 1
      %v493 = vadd.f32 %v491, %v492
      %v494 = vsel %vm437, %v401, 0.0
      %v495 = vrot.slane %v494, 4
      %v496 = vadd.f32 %v494, %v495
      %v497 = vrot.slane %v496, 2
      %v498 = vadd.f32 %v496, %v497
      %v499 = vrot.slane %v498, 1
      %v500 = vadd.f32 %v498, %v499
      %v501 = vsel %vm437, %v402, 0.0
      %v502 = vrot.slane %v501, 4
      %v503 = vadd.f32 %v501, %v502
      %v504 = vrot.slane %v503, 2
      %v505 = vadd.f32 %v503, %v504
      %v506 = vrot.slane %v505, 1
      %v507 = vadd.f32 %v505, %v506
      %v508 = vsel %vm437, %v403, 0.0
      %v509 = vrot.slane %v508, 4
      %v510 = vadd.f32 %v508, %v509
      %v511 = vrot.slane %v510, 2
      %v512 = vadd.f32 %v510, %v511
      %v513 = vrot.slane %v512, 1
      %v514 = vadd.f32 %v512, %v513
      %v515 = vsel %vm437, %v404, 0.0
      %v516 = vrot.slane %v515, 4
      %v517 = vadd.f32 %v515, %v516
      %v518 = vrot.slane %v517, 2
      %v519 = vadd.f32 %v517, %v518
      %v520 = vrot.slane %v519, 1
      %v521 = vadd.f32 %v519, %v520
      %v522 = vsel %vm437, %v405, 0.0
      %v523 = vrot.slane %v522, 4
      %v524 = vadd.f32 %v522, %v523
      %v525 = vrot.slane %v524, 2
      %v526 = vadd.f32 %v524, %v525
      %v527 = vrot.slane %v526, 1
      %v528 = vadd.f32 %v526, %v527
      %v529 = vsel %vm437, %v406, 0.0
      %v530 = vrot.slane %v529, 4
      %v531 = vadd.f32 %v529, %v530
      %v532 = vrot.slane %v531, 2
      %v533 = vadd.f32 %v531, %v532
      %v534 = vrot.slane %v533, 1
      %v535 = vadd.f32 %v533, %v534
      %v536 = vsel %vm437, %v407, 0.0
      %v537 = vrot.slane %v536, 4
      %v538 = vadd.f32 %v536, %v537
      %v539 = vrot.slane %v538, 2
      %v540 = vadd.f32 %v538, %v539
      %v541 = vrot.slane %v540, 1
      %v542 = vadd.f32 %v540, %v541
      %v543 = vsel %vm437, %v408, 0.0
      %v544 = vrot.slane %v543, 4
      %v545 = vadd.f32 %v543, %v544
      %v546 = vrot.slane %v545, 2
      %v547 = vadd.f32 %v545, %v546
      %v548 = vrot.slane %v547, 1
      %v549 = vadd.f32 %v547, %v548
      %v550 = vsel %vm437, %v409, 0.0
      %v551 = vrot.slane %v550, 4
      %v552 = vadd.f32 %v550, %v551
      %v553 = vrot.slane %v552, 2
      %v554 = vadd.f32 %v552, %v553
      %v555 = vrot.slane %v554, 1
      %v556 = vadd.f32 %v554, %v555
      %v557 = vsel %vm437, %v410, 0.0
      %v558 = vrot.slane %v557, 4
      %v559 = vadd.f32 %v557, %v558
      %v560 = vrot.slane %v559, 2
      %v561 = vadd.f32 %v559, %v560
      %v562 = vrot.slane %v561, 1
      %v563 = vadd.f32 %v561, %v562
      %v564 = vsel %vm437, %v411, 0.0
      %v565 = vrot.slane %v564, 4
      %v566 = vadd.f32 %v564, %v565
      %v567 = vrot.slane %v566, 2
      %v568 = vadd.f32 %v566, %v567
      %v569 = vrot.slane %v568, 1
      %v570 = vadd.f32 %v568, %v569
      %v571 = vsel %vm437, %v412, 0.0
      %v572 = vrot.slane %v571, 4
      %v573 = vadd.f32 %v571, %v572
      %v574 = vrot.slane %v573, 2
      %v575 = vadd.f32 %v573, %v574
      %v576 = vrot.slane %v575, 1
      %v577 = vadd.f32 %v575, %v576
      %v578 = vsel %vm437, %v413, 0.0
      %v579 = vrot.slane %v578, 4
      %v580 = vadd.f32 %v578, %v579
      %v581 = vrot.slane %v580, 2
      %v582 = vadd.f32 %v580, %v581
      %v583 = vrot.slane %v582, 1
      %v584 = vadd.f32 %v582, %v583
      %v585 = vsel %vm437, %v414, 0.0
      %v586 = vrot.slane %v585, 4
      %v587 = vadd.f32 %v585, %v586
      %v588 = vrot.slane %v587, 2
      %v589 = vadd.f32 %v587, %v588
      %v590 = vrot.slane %v589, 1
      %v591 = vadd.f32 %v589, %v590
      %v592 = vsel %vm437, %v415, 0.0
      %v593 = vrot.slane %v592, 4
      %v594 = vadd.f32 %v592, %v593
      %v595 = vrot.slane %v594, 2
      %v596 = vadd.f32 %v594, %v595
      %v597 = vrot.slane %v596, 1
      %v598 = vadd.f32 %v596, %v597
      %v599 = vsel %vm437, %v416, 0.0
      %v600 = vrot.slane %v599, 4
      %v601 = vadd.f32 %v599, %v600
      %v602 = vrot.slane %v601, 2
      %v603 = vadd.f32 %v601, %v602
      %v604 = vrot.slane %v603, 1
      %v605 = vadd.f32 %v603, %v604
      %v606 = vsel %vm437, %v417, 0.0
      %v607 = vrot.slane %v606, 4
      %v608 = vadd.f32 %v606, %v607
      %v609 = vrot.slane %v608, 2
      %v610 = vadd.f32 %v608, %v609
      %v611 = vrot.slane %v610, 1
      %v612 = vadd.f32 %v610, %v611
      %v613 = vsel %vm437, %v418, 0.0
      %v614 = vrot.slane %v613, 4
      %v615 = vadd.f32 %v613, %v614
      %v616 = vrot.slane %v615, 2
      %v617 = vadd.f32 %v615, %v616
      %v618 = vrot.slane %v617, 1
      %v619 = vadd.f32 %v617, %v618
      %v620 = vsel %vm437, %v419, 0.0
      %v621 = vrot.slane %v620, 4
      %v622 = vadd.f32 %v620, %v621
      %v623 = vrot.slane %v622, 2
      %v624 = vadd.f32 %v622, %v623
      %v625 = vrot.slane %v624, 1
      %v626 = vadd.f32 %v624, %v625
      %v627 = vsel %vm437, %v420, 0.0
      %v628 = vrot.slane %v627, 4
      %v629 = vadd.f32 %v627, %v628
      %v630 = vrot.slane %v629, 2
      %v631 = vadd.f32 %v629, %v630
      %v632 = vrot.slane %v631, 1
      %v633 = vadd.f32 %v631, %v632
      %v634 = vsel %vm437, %v421, 0.0
      %v635 = vrot.slane %v634, 4
      %v636 = vadd.f32 %v634, %v635
      %v637 = vrot.slane %v636, 2
      %v638 = vadd.f32 %v636, %v637
      %v639 = vrot.slane %v638, 1
      %v640 = vadd.f32 %v638, %v639
      %v641 = vsel %vm437, %v422, 0.0
      %v642 = vrot.slane %v641, 4
      %v643 = vadd.f32 %v641, %v642
      %v644 = vrot.slane %v643, 2
      %v645 = vadd.f32 %v643, %v644
      %v646 = vrot.slane %v645, 1
      %v647 = vadd.f32 %v645, %v646
      %v648 = vsel %vm437, %v423, 0.0
      %v649 = vrot.slane %v648, 4
      %v650 = vadd.f32 %v648, %v649
      %v651 = vrot.slane %v650, 2
      %v652 = vadd.f32 %v650, %v651
      %v653 = vrot.slane %v652, 1
      %v654 = vadd.f32 %v652, %v653
      %v655 = vsel %vm437, %v424, 0.0
      %v656 = vrot.slane %v655, 4
      %v657 = vadd.f32 %v655, %v656
      %v658 = vrot.slane %v657, 2
      %v659 = vadd.f32 %v657, %v658
      %v660 = vrot.slane %v659, 1
      %v661 = vadd.f32 %v659, %v660
      %v662 = vsub.f32 %v444, %v393
      %v663 = vsub.f32 %v451, %v394
      %v664 = vsub.f32 %v458, %v395
      %v665 = vsub.f32 %v465, %v396
      %v666 = vsub.f32 %v472, %v397
      %v667 = vsub.f32 %v479, %v398
      %v668 = vsub.f32 %v486, %v399
      %v669 = vsub.f32 %v493, %v400
      %v670 = vsub.f32 %v500, %v401
      %v671 = vsub.f32 %v507, %v402
      %v672 = vsub.f32 %v514, %v403
      %v673 = vsub.f32 %v521, %v404
      %v674 = vsub.f32 %v528, %v405
      %v675 = vsub.f32 %v535, %v406
      %v676 = vsub.f32 %v542, %v407
      %v677 = vsub.f32 %v549, %v408
      %v678 = vsub.f32 %v556, %v409
      %v679 = vsub.f32 %v563, %v410
      %v680 = vsub.f32 %v570, %v411
      %v681 = vsub.f32 %v577, %v412
      %v682 = vsub.f32 %v584, %v413
      %v683 = vsub.f32 %v591, %v414
      %v684 = vsub.f32 %v598, %v415
      %v685 = vsub.f32 %v605, %v416
      %v686 = vsub.f32 %v612, %v417
      %v687 = vsub.f32 %v619, %v418
      %v688 = vsub.f32 %v626, %v419
      %v689 = vsub.f32 %v633, %v420
      %v690 = vsub.f32 %v640, %v421
      %v691 = vsub.f32 %v647, %v422
      %v692 = vsub.f32 %v654, %v423
      %v693 = vsub.f32 %v661, %v424
      %v694 = vsel %vm427, %v662, %v393
      %v695 = vsel %vm427, %v663, %v394
      %v696 = vsel %vm427, %v664, %v395
      %v697 = vsel %vm427, %v665, %v396
      %v698 = vsel %vm427, %v666, %v397
      %v699 = vsel %vm427, %v667, %v398
      %v700 = vsel %vm427, %v668, %v399
      %v701 = vsel %vm427, %v669, %v400
      %v702 = vsel %vm427, %v670, %v401
      %v703 = vsel %vm427, %v671, %v402
      %v704 = vsel %vm427, %v672, %v403
      %v705 = vsel %vm427, %v673, %v404
      %v706 = vsel %vm427, %v674, %v405
      %v707 = vsel %vm427, %v675, %v406
      %v708 = vsel %vm427, %v676, %v407
      %v709 = vsel %vm427, %v677, %v408
      %v710 = vsel %vm427, %v678, %v409
      %v711 = vsel %vm427, %v679, %v410
      %v712 = vsel %vm427, %v680, %v411
      %v713 = vsel %vm427, %v681, %v412
      %v714 = vsel %vm427, %v682, %v413
      %v715 = vsel %vm427, %v683, %v414
      %v716 = vsel %vm427, %v684, %v415
      %v717 = vsel %vm427, %v685, %v416
      %v718 = vsel %vm427, %v686, %v417
      %v719 = vsel %vm427, %v687, %v418
      %v720 = vsel %vm427, %v688, %v419
      %v721 = vsel %vm427, %v689, %v420
      %v722 = vsel %vm427, %v690, %v421
      %v723 = vsel %vm427, %v691, %v422
      %v724 = vsel %vm427, %v692, %v423
      %v725 = vsel %vm427, %v693, %v424
      %v727 = vsel %vm437, %v694, 0
      %v730 = vsel %vm437, %v695, 0
      %v733 = vsel %vm437, %v696, 0
      %v736 = vsel %vm437, %v697, 0
      %v739 = vsel %vm437, %v698, 0
      %v742 = vsel %vm437, %v699, 0
      %v745 = vsel %vm437, %v700, 0
      %v748 = vsel %vm437, %v701, 0
      %v751 = vsel %vm437, %v702, 0
      %v754 = vsel %vm437, %v703, 0
      %v757 = vsel %vm437, %v704, 0
      %v760 = vsel %vm437, %v705, 0
      %v763 = vsel %vm437, %v706, 0
      %v766 = vsel %vm437, %v707, 0
      %v769 = vsel %vm437, %v708, 0
      %v772 = vsel %vm437, %v709, 0
      %v775 = vsel %vm437, %v710, 0
      %v778 = vsel %vm437, %v711, 0
      %v781 = vsel %vm437, %v712, 0
      %v784 = vsel %vm437, %v713, 0
      %v787 = vsel %vm437, %v714, 0
      %v790 = vsel %vm437, %v715, 0
      %v793 = vsel %vm437, %v716, 0
      %v796 = vsel %vm437, %v717, 0
      %v799 = vsel %vm437, %v718, 0
      %v802 = vsel %vm437, %v719, 0
      %v805 = vsel %vm437, %v720, 0
      %v808 = vsel %vm437, %v721, 0
      %v811 = vsel %vm437, %v722, 0
      %v814 = vsel %vm437, %v723, 0
      %v817 = vsel %vm437, %v724, 0
      %v820 = vsel %vm437, %v725, 0
      %822 = vmatpush.msra.mxu0 0.0
      %823 = vmatpush.msra.mxu0 0.0
      %824 = vmatpush.msra.mxu0 0.0
      %825 = vmatpush.msra.mxu0 0.0
      %826 = vmatpush.msra.mxu0 0.0
      %827 = vmatpush.msra.mxu0 0.0
      %828 = vmatpush.msra.mxu0 0.0
      %829 = vmatpush.msra.mxu0 0.0
      %830 = vmatpush.msra.mxu0 %v435
      %831 = vmatpush.msra.mxu0 %v434
      %832 = vmatpush.msra.mxu0 %v433
      %833 = vmatpush.msra.mxu0 %v432
      %834 = vmatpush.msra.mxu0 %v431
      %835 = vmatpush.msra.mxu0 %v430
      %836 = vmatpush.msra.mxu0 %v429
      %837 = vmatpush.msra.mxu0 %v428
      %838 = vmatmul.f32.gmra.mxu0 %v727
      %v839 = vpop.f32.mrf.mxu0
      %v840 = vadd.f32 0.0, %v839
      %841 = vmatmul.f32.gmra.mxu0 %v730
      %v842 = vpop.f32.mrf.mxu0
      %v843 = vadd.f32 0.0, %v842
      %844 = vmatmul.f32.gmra.mxu0 %v733
      %v845 = vpop.f32.mrf.mxu0
      %v846 = vadd.f32 0.0, %v845
      %847 = vmatmul.f32.gmra.mxu0 %v736
      %v848 = vpop.f32.mrf.mxu0
      %v849 = vadd.f32 0.0, %v848
      %850 = vmatmul.f32.gmra.mxu0 %v739
      %v851 = vpop.f32.mrf.mxu0
      %v852 = vadd.f32 0.0, %v851
      %853 = vmatmul.f32.gmra.mxu0 %v742
      %v854 = vpop.f32.mrf.mxu0
      %v855 = vadd.f32 0.0, %v854
      %856 = vmatmul.f32.gmra.mxu0 %v745
      %v857 = vpop.f32.mrf.mxu0
      %v858 = vadd.f32 0.0, %v857
      %859 = vmatmul.f32.gmra.mxu0 %v748
      %v860 = vpop.f32.mrf.mxu0
      %v861 = vadd.f32 0.0, %v860
      %862 = vmatmul.f32.gmra.mxu0 %v751
      %v863 = vpop.f32.mrf.mxu0
      %v864 = vadd.f32 0.0, %v863
      %865 = vmatmul.f32.gmra.mxu0 %v754
      %v866 = vpop.f32.mrf.mxu0
      %v867 = vadd.f32 0.0, %v866
      %868 = vmatmul.f32.gmra.mxu0 %v757
      %v869 = vpop.f32.mrf.mxu0
      %v870 = vadd.f32 0.0, %v869
      %871 = vmatmul.f32.gmra.mxu0 %v760
      %v872 = vpop.f32.mrf.mxu0
      %v873 = vadd.f32 0.0, %v872
      %874 = vmatmul.f32.gmra.mxu0 %v763
      %v875 = vpop.f32.mrf.mxu0
      %v876 = vadd.f32 0.0, %v875
      %877 = vmatmul.f32.gmra.mxu0 %v766
      %v878 = vpop.f32.mrf.mxu0
      %v879 = vadd.f32 0.0, %v878
      %880 = vmatmul.f32.gmra.mxu0 %v769
      %v881 = vpop.f32.mrf.mxu0
      %v882 = vadd.f32 0.0, %v881
      %883 = vmatmul.f32.gmra.mxu0 %v772
      %v884 = vpop.f32.mrf.mxu0
      %v885 = vadd.f32 0.0, %v884
      %886 = vmatmul.f32.gmra.mxu0 %v775
      %v887 = vpop.f32.mrf.mxu0
      %v888 = vadd.f32 0.0, %v887
      %889 = vmatmul.f32.gmra.mxu0 %v778
      %v890 = vpop.f32.mrf.mxu0
      %v891 = vadd.f32 0.0, %v890
      %892 = vmatmul.f32.gmra.mxu0 %v781
      %v893 = vpop.f32.mrf.mxu0
      %v894 = vadd.f32 0.0, %v893
      %895 = vmatmul.f32.gmra.mxu0 %v784
      %v896 = vpop.f32.mrf.mxu0
      %v897 = vadd.f32 0.0, %v896
      %898 = vmatmul.f32.gmra.mxu0 %v787
      %v899 = vpop.f32.mrf.mxu0
      %v900 = vadd.f32 0.0, %v899
      %901 = vmatmul.f32.gmra.mxu0 %v790
      %v902 = vpop.f32.mrf.mxu0
      %v903 = vadd.f32 0.0, %v902
      %904 = vmatmul.f32.gmra.mxu0 %v793
      %v905 = vpop.f32.mrf.mxu0
      %v906 = vadd.f32 0.0, %v905
      %907 = vmatmul.f32.gmra.mxu0 %v796
      %v908 = vpop.f32.mrf.mxu0
      %v909 = vadd.f32 0.0, %v908
      %910 = vmatmul.f32.gmra.mxu0 %v799
      %v911 = vpop.f32.mrf.mxu0
      %v912 = vadd.f32 0.0, %v911
      %913 = vmatmul.f32.gmra.mxu0 %v802
      %v914 = vpop.f32.mrf.mxu0
      %v915 = vadd.f32 0.0, %v914
      %916 = vmatmul.f32.gmra.mxu0 %v805
      %v917 = vpop.f32.mrf.mxu0
      %v918 = vadd.f32 0.0, %v917
      %919 = vmatmul.f32.gmra.mxu0 %v808
      %v920 = vpop.f32.mrf.mxu0
      %v921 = vadd.f32 0.0, %v920
      %922 = vmatmul.f32.gmra.mxu0 %v811
      %v923 = vpop.f32.mrf.mxu0
      %v924 = vadd.f32 0.0, %v923
      %925 = vmatmul.f32.gmra.mxu0 %v814
      %v926 = vpop.f32.mrf.mxu0
      %v927 = vadd.f32 0.0, %v926
      %928 = vmatmul.f32.gmra.mxu0 %v817
      %v929 = vpop.f32.mrf.mxu0
      %v930 = vadd.f32 0.0, %v929
      %931 = vmatmul.f32.gmra.mxu0 %v820
      %v932 = vpop.f32.mrf.mxu0
      %v933 = vadd.f32 0.0, %v932
      %934 = vdwg.mxu0
      %v935 = vadd.f32 %v393, %v840
      %v936 = vadd.f32 %v394, %v843
      %v937 = vadd.f32 %v395, %v846
      %v938 = vadd.f32 %v396, %v849
      %v939 = vadd.f32 %v397, %v852
      %v940 = vadd.f32 %v398, %v855
      %v941 = vadd.f32 %v399, %v858
      %v942 = vadd.f32 %v400, %v861
      %v943 = vadd.f32 %v401, %v864
      %v944 = vadd.f32 %v402, %v867
      %v945 = vadd.f32 %v403, %v870
      %v946 = vadd.f32 %v404, %v873
      %v947 = vadd.f32 %v405, %v876
      %v948 = vadd.f32 %v406, %v879
      %v949 = vadd.f32 %v407, %v882
      %v950 = vadd.f32 %v408, %v885
      %v951 = vadd.f32 %v409, %v888
      %v952 = vadd.f32 %v410, %v891
      %v953 = vadd.f32 %v411, %v894
      %v954 = vadd.f32 %v412, %v897
      %v955 = vadd.f32 %v413, %v900
      %v956 = vadd.f32 %v414, %v903
      %v957 = vadd.f32 %v415, %v906
      %v958 = vadd.f32 %v416, %v909
      %v959 = vadd.f32 %v417, %v912
      %v960 = vadd.f32 %v418, %v915
      %v961 = vadd.f32 %v419, %v918
      %v962 = vadd.f32 %v420, %v921
      %v963 = vadd.f32 %v421, %v924
      %v964 = vadd.f32 %v422, %v927
      %v965 = vadd.f32 %v423, %v930
      %v966 = vadd.f32 %v424, %v933
      %v967 = vperm.slane %v436, 0
      %v968 = vadd.f32 %v935, %v967
      %v969 = vadd.f32 %v936, %v967
      %v970 = vadd.f32 %v937, %v967
      %v971 = vadd.f32 %v938, %v967
      %v972 = vadd.f32 %v939, %v967
      %v973 = vadd.f32 %v940, %v967
      %v974 = vadd.f32 %v941, %v967
      %v975 = vadd.f32 %v942, %v967
      %v976 = vadd.f32 %v943, %v967
      %v977 = vadd.f32 %v944, %v967
      %v978 = vadd.f32 %v945, %v967
      %v979 = vadd.f32 %v946, %v967
      %v980 = vadd.f32 %v947, %v967
      %v981 = vadd.f32 %v948, %v967
      %v982 = vadd.f32 %v949, %v967
      %v983 = vadd.f32 %v950, %v967
      %v984 = vadd.f32 %v951, %v967
      %v985 = vadd.f32 %v952, %v967
      %v986 = vadd.f32 %v953, %v967
      %v987 = vadd.f32 %v954, %v967
      %v988 = vadd.f32 %v955, %v967
      %v989 = vadd.f32 %v956, %v967
      %v990 = vadd.f32 %v957, %v967
      %v991 = vadd.f32 %v958, %v967
      %v992 = vadd.f32 %v959, %v967
      %v993 = vadd.f32 %v960, %v967
      %v994 = vadd.f32 %v961, %v967
      %v995 = vadd.f32 %v962, %v967
      %v996 = vadd.f32 %v963, %v967
      %v997 = vadd.f32 %v964, %v967
      %v998 = vadd.f32 %v965, %v967
      %v999 = vadd.f32 %v966, %v967
      %v1000 = vtanh.pop %v968
      %v1001 = vtanh.pop %v969
      %v1002 = vtanh.pop %v970
      %v1003 = vtanh.pop %v971
      %v1004 = vtanh.pop %v972
      %v1005 = vtanh.pop %v973
      %v1006 = vtanh.pop %v974
      %v1007 = vtanh.pop %v975
      %v1008 = vtanh.pop %v976
      %v1009 = vtanh.pop %v977
      %v1010 = vtanh.pop %v978
      %v1011 = vtanh.pop %v979
      %v1012 = vtanh.pop %v980
      %v1013 = vtanh.pop %v981
      %v1014 = vtanh.pop %v982
      %v1015 = vtanh.pop %v983
      %v1016 = vtanh.pop %v984
      %v1017 = vtanh.pop %v985
      %v1018 = vtanh.pop %v986
      %v1019 = vtanh.pop %v987
      %v1020 = vtanh.pop %v988
      %v1021 = vtanh.pop %v989
      %v1022 = vtanh.pop %v990
      %v1023 = vtanh.pop %v991
      %v1024 = vtanh.pop %v992
      %v1025 = vtanh.pop %v993
      %v1026 = vtanh.pop %v994
      %v1027 = vtanh.pop %v995
      %v1028 = vtanh.pop %v996
      %v1029 = vtanh.pop %v997
      %v1030 = vtanh.pop %v998
      %v1031 = vtanh.pop %v999
      %v1032 = vld [vmem:[%s1 + $0x58] sm:$0xff]
      %v1033 = vld [vmem:[%s1 + $0x60] sm:$0xff]
      %v1034 = vld [vmem:[%s1 + $0x68] sm:$0xff]
      %v1035 = vld [vmem:[%s1 + $0x70] sm:$0xff]
      %v1036 = vld [vmem:[%s1 + $0x78] sm:$0xff]
      %v1037 = vld [vmem:[%s1 + $0x80] sm:$0xff]
      %v1038 = vld [vmem:[%s1 + $0x88] sm:$0xff]
      %v1039 = vld [vmem:[%s1 + $0x90] sm:$0xff]
      %v1040 = vld [vmem:[%s1 + $0xa0] sm:$0x1]
      %v1041 = vsel %vm437, %v1000, 0.0
      %v1042 = vrot.slane %v1041, 4
      %v1043 = vadd.f32 %v1041, %v1042
      %v1044 = vrot.slane %v1043, 2
      %v1045 = vadd.f32 %v1043, %v1044
      %v1046 = vrot.slane %v1045, 1
      %v1047 = vadd.f32 %v1045, %v1046
      %v1048 = vsel %vm437, %v1001, 0.0
      %v1049 = vrot.slane %v1048, 4
      %v1050 = vadd.f32 %v1048, %v1049
      %v1051 = vrot.slane %v1050, 2
      %v1052 = vadd.f32 %v1050, %v1051
      %v1053 = vrot.slane %v1052, 1
      %v1054 = vadd.f32 %v1052, %v1053
      %v1055 = vsel %vm437, %v1002, 0.0
      %v1056 = vrot.slane %v1055, 4
      %v1057 = vadd.f32 %v1055, %v1056
      %v1058 = vrot.slane %v1057, 2
      %v1059 = vadd.f32 %v1057, %v1058
      %v1060 = vrot.slane %v1059, 1
      %v1061 = vadd.f32 %v1059, %v1060
      %v1062 = vsel %vm437, %v1003, 0.0
      %v1063 = vrot.slane %v1062, 4
      %v1064 = vadd.f32 %v1062, %v1063
      %v1065 = vrot.slane %v1064, 2
      %v1066 = vadd.f32 %v1064, %v1065
      %v1067 = vrot.slane %v1066, 1
      %v1068 = vadd.f32 %v1066, %v1067
      %v1069 = vsel %vm437, %v1004, 0.0
      %v1070 = vrot.slane %v1069, 4
      %v1071 = vadd.f32 %v1069, %v1070
      %v1072 = vrot.slane %v1071, 2
      %v1073 = vadd.f32 %v1071, %v1072
      %v1074 = vrot.slane %v1073, 1
      %v1075 = vadd.f32 %v1073, %v1074
      %v1076 = vsel %vm437, %v1005, 0.0
      %v1077 = vrot.slane %v1076, 4
      %v1078 = vadd.f32 %v1076, %v1077
      %v1079 = vrot.slane %v1078, 2
      %v1080 = vadd.f32 %v1078, %v1079
      %v1081 = vrot.slane %v1080, 1
      %v1082 = vadd.f32 %v1080, %v1081
      %v1083 = vsel %vm437, %v1006, 0.0
      %v1084 = vrot.slane %v1083, 4
      %v1085 = vadd.f32 %v1083, %v1084
      %v1086 = vrot.slane %v1085, 2
      %v1087 = vadd.f32 %v1085, %v1086
      %v1088 = vrot.slane %v1087, 1
      %v1089 = vadd.f32 %v1087, %v1088
      %v1090 = vsel %vm437, %v1007, 0.0
      %v1091 = vrot.slane %v1090, 4
      %v1092 = vadd.f32 %v1090, %v1091
      %v1093 = vrot.slane %v1092, 2
      %v1094 = vadd.f32 %v1092, %v1093
      %v1095 = vrot.slane %v1094, 1
      %v1096 = vadd.f32 %v1094, %v1095
      %v1097 = vsel %vm437, %v1008, 0.0
      %v1098 = vrot.slane %v1097, 4
      %v1099 = vadd.f32 %v1097, %v1098
      %v1100 = vrot.slane %v1099, 2
      %v1101 = vadd.f32 %v1099, %v1100
      %v1102 = vrot.slane %v1101, 1
      %v1103 = vadd.f32 %v1101, %v1102
      %v1104 = vsel %vm437, %v1009, 0.0
      %v1105 = vrot.slane %v1104, 4
      %v1106 = vadd.f32 %v1104, %v1105
      %v1107 = vrot.slane %v1106, 2
      %v1108 = vadd.f32 %v1106, %v1107
      %v1109 = vrot.slane %v1108, 1
      %v1110 = vadd.f32 %v1108, %v1109
      %v1111 = vsel %vm437, %v1010, 0.0
      %v1112 = vrot.slane %v1111, 4
      %v1113 = vadd.f32 %v1111, %v1112
      %v1114 = vrot.slane %v1113, 2
      %v1115 = vadd.f32 %v1113, %v1114
      %v1116 = vrot.slane %v1115, 1
      %v1117 = vadd.f32 %v1115, %v1116
      %v1118 = vsel %vm437, %v1011, 0.0
      %v1119 = vrot.slane %v1118, 4
      %v1120 = vadd.f32 %v1118, %v1119
      %v1121 = vrot.slane %v1120, 2
      %v1122 = vadd.f32 %v1120, %v1121
      %v1123 = vrot.slane %v1122, 1
      %v1124 = vadd.f32 %v1122, %v1123
      %v1125 = vsel %vm437, %v1012, 0.0
      %v1126 = vrot.slane %v1125, 4
      %v1127 = vadd.f32 %v1125, %v1126
      %v1128 = vrot.slane %v1127, 2
      %v1129 = vadd.f32 %v1127, %v1128
      %v1130 = vrot.slane %v1129, 1
      %v1131 = vadd.f32 %v1129, %v1130
      %v1132 = vsel %vm437, %v1013, 0.0
      %v1133 = vrot.slane %v1132, 4
      %v1134 = vadd.f32 %v1132, %v1133
      %v1135 = vrot.slane %v1134, 2
      %v1136 = vadd.f32 %v1134, %v1135
      %v1137 = vrot.slane %v1136, 1
      %v1138 = vadd.f32 %v1136, %v1137
      %v1139 = vsel %vm437, %v1014, 0.0
      %v1140 = vrot.slane %v1139, 4
      %v1141 = vadd.f32 %v1139, %v1140
      %v1142 = vrot.slane %v1141, 2
      %v1143 = vadd.f32 %v1141, %v1142
      %v1144 = vrot.slane %v1143, 1
      %v1145 = vadd.f32 %v1143, %v1144
      %v1146 = vsel %vm437, %v1015, 0.0
      %v1147 = vrot.slane %v1146, 4
      %v1148 = vadd.f32 %v1146, %v1147
      %v1149 = vrot.slane %v1148, 2
      %v1150 = vadd.f32 %v1148, %v1149
      %v1151 = vrot.slane %v1150, 1
      %v1152 = vadd.f32 %v1150, %v1151
      %v1153 = vsel %vm437, %v1016, 0.0
      %v1154 = vrot.slane %v1153, 4
      %v1155 = vadd.f32 %v1153, %v1154
      %v1156 = vrot.slane %v1155, 2
      %v1157 = vadd.f32 %v1155, %v1156
      %v1158 = vrot.slane %v1157, 1
      %v1159 = vadd.f32 %v1157, %v1158
      %v1160 = vsel %vm437, %v1017, 0.0
      %v1161 = vrot.slane %v1160, 4
      %v1162 = vadd.f32 %v1160, %v1161
      %v1163 = vrot.slane %v1162, 2
      %v1164 = vadd.f32 %v1162, %v1163
      %v1165 = vrot.slane %v1164, 1
      %v1166 = vadd.f32 %v1164, %v1165
      %v1167 = vsel %vm437, %v1018, 0.0
      %v1168 = vrot.slane %v1167, 4
      %v1169 = vadd.f32 %v1167, %v1168
      %v1170 = vrot.slane %v1169, 2
      %v1171 = vadd.f32 %v1169, %v1170
      %v1172 = vrot.slane %v1171, 1
      %v1173 = vadd.f32 %v1171, %v1172
      %v1174 = vsel %vm437, %v1019, 0.0
      %v1175 = vrot.slane %v1174, 4
      %v1176 = vadd.f32 %v1174, %v1175
      %v1177 = vrot.slane %v1176, 2
      %v1178 = vadd.f32 %v1176, %v1177
      %v1179 = vrot.slane %v1178, 1
      %v1180 = vadd.f32 %v1178, %v1179
      %v1181 = vsel %vm437, %v1020, 0.0
      %v1182 = vrot.slane %v1181, 4
      %v1183 = vadd.f32 %v1181, %v1182
      %v1184 = vrot.slane %v1183, 2
      %v1185 = vadd.f32 %v1183, %v1184
      %v1186 = vrot.slane %v1185, 1
      %v1187 = vadd.f32 %v1185, %v1186
      %v1188 = vsel %vm437, %v1021, 0.0
      %v1189 = vrot.slane %v1188, 4
      %v1190 = vadd.f32 %v1188, %v1189
      %v1191 = vrot.slane %v1190, 2
      %v1192 = vadd.f32 %v1190, %v1191
      %v1193 = vrot.slane %v1192, 1
      %v1194 = vadd.f32 %v1192, %v1193
      %v1195 = vsel %vm437, %v1022, 0.0
      %v1196 = vrot.slane %v1195, 4
      %v1197 = vadd.f32 %v1195, %v1196
      %v1198 = vrot.slane %v1197, 2
      %v1199 = vadd.f32 %v1197, %v1198
      %v1200 = vrot.slane %v1199, 1
      %v1201 = vadd.f32 %v1199, %v1200
      %v1202 = vsel %vm437, %v1023, 0.0
      %v1203 = vrot.slane %v1202, 4
      %v1204 = vadd.f32 %v1202, %v1203
      %v1205 = vrot.slane %v1204, 2
      %v1206 = vadd.f32 %v1204, %v1205
      %v1207 = vrot.slane %v1206, 1
      %v1208 = vadd.f32 %v1206, %v1207
      %v1209 = vsel %vm437, %v1024, 0.0
      %v1210 = vrot.slane %v1209, 4
      %v1211 = vadd.f32 %v1209, %v1210
      %v1212 = vrot.slane %v1211, 2
      %v1213 = vadd.f32 %v1211, %v1212
      %v1214 = vrot.slane %v1213, 1
      %v1215 = vadd.f32 %v1213, %v1214
      %v1216 = vsel %vm437, %v1025, 0.0
      %v1217 = vrot.slane %v1216, 4
      %v1218 = vadd.f32 %v1216, %v1217
      %v1219 = vrot.slane %v1218, 2
      %v1220 = vadd.f32 %v1218, %v1219
      %v1221 = vrot.slane %v1220, 1
      %v1222 = vadd.f32 %v1220, %v1221
      %v1223 = vsel %vm437, %v1026, 0.0
      %v1224 = vrot.slane %v1223, 4
      %v1225 = vadd.f32 %v1223, %v1224
      %v1226 = vrot.slane %v1225, 2
      %v1227 = vadd.f32 %v1225, %v1226
      %v1228 = vrot.slane %v1227, 1
      %v1229 = vadd.f32 %v1227, %v1228
      %v1230 = vsel %vm437, %v1027, 0.0
      %v1231 = vrot.slane %v1230, 4
      %v1232 = vadd.f32 %v1230, %v1231
      %v1233 = vrot.slane %v1232, 2
      %v1234 = vadd.f32 %v1232, %v1233
      %v1235 = vrot.slane %v1234, 1
      %v1236 = vadd.f32 %v1234, %v1235
      %v1237 = vsel %vm437, %v1028, 0.0
      %v1238 = vrot.slane %v1237, 4
      %v1239 = vadd.f32 %v1237, %v1238
      %v1240 = vrot.slane %v1239, 2
      %v1241 = vadd.f32 %v1239, %v1240
      %v1242 = vrot.slane %v1241, 1
      %v1243 = vadd.f32 %v1241, %v1242
      %v1244 = vsel %vm437, %v1029, 0.0
      %v1245 = vrot.slane %v1244, 4
      %v1246 = vadd.f32 %v1244, %v1245
      %v1247 = vrot.slane %v1246, 2
      %v1248 = vadd.f32 %v1246, %v1247
      %v1249 = vrot.slane %v1248, 1
      %v1250 = vadd.f32 %v1248, %v1249
      %v1251 = vsel %vm437, %v1030, 0.0
      %v1252 = vrot.slane %v1251, 4
      %v1253 = vadd.f32 %v1251, %v1252
      %v1254 = vrot.slane %v1253, 2
      %v1255 = vadd.f32 %v1253, %v1254
      %v1256 = vrot.slane %v1255, 1
      %v1257 = vadd.f32 %v1255, %v1256
      %v1258 = vsel %vm437, %v1031, 0.0
      %v1259 = vrot.slane %v1258, 4
      %v1260 = vadd.f32 %v1258, %v1259
      %v1261 = vrot.slane %v1260, 2
      %v1262 = vadd.f32 %v1260, %v1261
      %v1263 = vrot.slane %v1262, 1
      %v1264 = vadd.f32 %v1262, %v1263
      %v1265 = vsub.f32 %v1047, %v1000
      %v1266 = vsub.f32 %v1054, %v1001
      %v1267 = vsub.f32 %v1061, %v1002
      %v1268 = vsub.f32 %v1068, %v1003
      %v1269 = vsub.f32 %v1075, %v1004
      %v1270 = vsub.f32 %v1082, %v1005
      %v1271 = vsub.f32 %v1089, %v1006
      %v1272 = vsub.f32 %v1096, %v1007
      %v1273 = vsub.f32 %v1103, %v1008
      %v1274 = vsub.f32 %v1110, %v1009
      %v1275 = vsub.f32 %v1117, %v1010
      %v1276 = vsub.f32 %v1124, %v1011
      %v1277 = vsub.f32 %v1131, %v1012
      %v1278 = vsub.f32 %v1138, %v1013
      %v1279 = vsub.f32 %v1145, %v1014
      %v1280 = vsub.f32 %v1152, %v1015
      %v1281 = vsub.f32 %v1159, %v1016
      %v1282 = vsub.f32 %v1166, %v1017
      %v1283 = vsub.f32 %v1173, %v1018
      %v1284 = vsub.f32 %v1180, %v1019
      %v1285 = vsub.f32 %v1187, %v1020
      %v1286 = vsub.f32 %v1194, %v1021
      %v1287 = vsub.f32 %v1201, %v1022
      %v1288 = vsub.f32 %v1208, %v1023
      %v1289 = vsub.f32 %v1215, %v1024
      %v1290 = vsub.f32 %v1222, %v1025
      %v1291 = vsub.f32 %v1229, %v1026
      %v1292 = vsub.f32 %v1236, %v1027
      %v1293 = vsub.f32 %v1243, %v1028
      %v1294 = vsub.f32 %v1250, %v1029
      %v1295 = vsub.f32 %v1257, %v1030
      %v1296 = vsub.f32 %v1264, %v1031
      %v1297 = vsel %vm427, %v1265, %v1000
      %v1298 = vsel %vm427, %v1266, %v1001
      %v1299 = vsel %vm427, %v1267, %v1002
      %v1300 = vsel %vm427, %v1268, %v1003
      %v1301 = vsel %vm427, %v1269, %v1004
      %v1302 = vsel %vm427, %v1270, %v1005
      %v1303 = vsel %vm427, %v1271, %v1006
      %v1304 = vsel %vm427, %v1272, %v1007
      %v1305 = vsel %vm427, %v1273, %v1008
      %v1306 = vsel %vm427, %v1274, %v1009
      %v1307 = vsel %vm427, %v1275, %v1010
      %v1308 = vsel %vm427, %v1276, %v1011
      %v1309 = vsel %vm427, %v1277, %v1012
      %v1310 = vsel %vm427, %v1278, %v1013
      %v1311 = vsel %vm427, %v1279, %v1014
      %v1312 = vsel %vm427, %v1280, %v1015
      %v1313 = vsel %vm427, %v1281, %v1016
      %v1314 = vsel %vm427, %v1282, %v1017
      %v1315 = vsel %vm427, %v1283, %v1018
      %v1316 = vsel %vm427, %v1284, %v1019
      %v1317 = vsel %vm427, %v1285, %v1020
      %v1318 = vsel %vm427, %v1286, %v1021
      %v1319 = vsel %vm427, %v1287, %v1022
      %v1320 = vsel %vm427, %v1288, %v1023
      %v1321 = vsel %vm427, %v1289, %v1024
      %v1322 = vsel %vm427, %v1290, %v1025
      %v1323 = vsel %vm427, %v1291, %v1026
      %v1324 = vsel %vm427, %v1292, %v1027
      %v1325 = vsel %vm427, %v1293, %v1028
      %v1326 = vsel %vm427, %v1294, %v1029
      %v1327 = vsel %vm427, %v1295, %v1030
      %v1328 = vsel %vm427, %v1296, %v1031
      %v1330 = vsel %vm437, %v1297, 0
      %v1333 = vsel %vm437, %v1298, 0
      %v1336 = vsel %vm437, %v1299, 0
      %v1339 = vsel %vm437, %v1300, 0
      %v1342 = vsel %vm437, %v1301, 0
      %v1345 = vsel %vm437, %v1302, 0
      %v1348 = vsel %vm437, %v1303, 0
      %v1351 = vsel %vm437, %v1304, 0
      %v1354 = vsel %vm437, %v1305, 0
      %v1357 = vsel %vm437, %v1306, 0
      %v1360 = vsel %vm437, %v1307, 0
      %v1363 = vsel %vm437, %v1308, 0
      %v1366 = vsel %vm437, %v1309, 0
      %v1369 = vsel %vm437, %v1310, 0
      %v1372 = vsel %vm437, %v1311, 0
      %v1375 = vsel %vm437, %v1312, 0
      %v1378 = vsel %vm437, %v1313, 0
      %v1381 = vsel %vm437, %v1314, 0
      %v1384 = vsel %vm437, %v1315, 0
      %v1387 = vsel %vm437, %v1316, 0
      %v1390 = vsel %vm437, %v1317, 0
      %v1393 = vsel %vm437, %v1318, 0
      %v1396 = vsel %vm437, %v1319, 0
      %v1399 = vsel %vm437, %v1320, 0
      %v1402 = vsel %vm437, %v1321, 0
      %v1405 = vsel %vm437, %v1322, 0
      %v1408 = vsel %vm437, %v1323, 0
      %v1411 = vsel %vm437, %v1324, 0
      %v1414 = vsel %vm437, %v1325, 0
      %v1417 = vsel %vm437, %v1326, 0
      %v1420 = vsel %vm437, %v1327, 0
      %v1423 = vsel %vm437, %v1328, 0
      %1425 = vmatpush.msra.mxu0 0.0
      %1426 = vmatpush.msra.mxu0 0.0
      %1427 = vmatpush.msra.mxu0 0.0
      %1428 = vmatpush.msra.mxu0 0.0
      %1429 = vmatpush.msra.mxu0 0.0
      %1430 = vmatpush.msra.mxu0 0.0
      %1431 = vmatpush.msra.mxu0 0.0
      %1432 = vmatpush.msra.mxu0 0.0
      %1433 = vmatpush.msra.mxu0 %v1039
      %1434 = vmatpush.msra.mxu0 %v1038
      %1435 = vmatpush.msra.mxu0 %v1037
      %1436 = vmatpush.msra.mxu0 %v1036
      %1437 = vmatpush.msra.mxu0 %v1035
      %1438 = vmatpush.msra.mxu0 %v1034
      %1439 = vmatpush.msra.mxu0 %v1033
      %1440 = vmatpush.msra.mxu0 %v1032
      %1441 = vmatmul.f32.gmra.mxu0 %v1330
      %v1442 = vpop.f32.mrf.mxu0
      %v1443 = vadd.f32 0.0, %v1442
      %1444 = vmatmul.f32.gmra.mxu0 %v1333
      %v1445 = vpop.f32.mrf.mxu0
      %v1446 = vadd.f32 0.0, %v1445
      %1447 = vmatmul.f32.gmra.mxu0 %v1336
      %v1448 = vpop.f32.mrf.mxu0
      %v1449 = vadd.f32 0.0, %v1448
      %1450 = vmatmul.f32.gmra.mxu0 %v1339
      %v1451 = vpop.f32.mrf.mxu0
      %v1452 = vadd.f32 0.0, %v1451
      %1453 = vmatmul.f32.gmra.mxu0 %v1342
      %v1454 = vpop.f32.mrf.mxu0
      %v1455 = vadd.f32 0.0, %v1454
      %1456 = vmatmul.f32.gmra.mxu0 %v1345
      %v1457 = vpop.f32.mrf.mxu0
      %v1458 = vadd.f32 0.0, %v1457
      %1459 = vmatmul.f32.gmra.mxu0 %v1348
      %v1460 = vpop.f32.mrf.mxu0
      %v1461 = vadd.f32 0.0, %v1460
      %1462 = vmatmul.f32.gmra.mxu0 %v1351
      %v1463 = vpop.f32.mrf.mxu0
      %v1464 = vadd.f32 0.0, %v1463
      %1465 = vmatmul.f32.gmra.mxu0 %v1354
      %v1466 = vpop.f32.mrf.mxu0
      %v1467 = vadd.f32 0.0, %v1466
      %1468 = vmatmul.f32.gmra.mxu0 %v1357
      %v1469 = vpop.f32.mrf.mxu0
      %v1470 = vadd.f32 0.0, %v1469
      %1471 = vmatmul.f32.gmra.mxu0 %v1360
      %v1472 = vpop.f32.mrf.mxu0
      %v1473 = vadd.f32 0.0, %v1472
      %1474 = vmatmul.f32.gmra.mxu0 %v1363
      %v1475 = vpop.f32.mrf.mxu0
      %v1476 = vadd.f32 0.0, %v1475
      %1477 = vmatmul.f32.gmra.mxu0 %v1366
      %v1478 = vpop.f32.mrf.mxu0
      %v1479 = vadd.f32 0.0, %v1478
      %1480 = vmatmul.f32.gmra.mxu0 %v1369
      %v1481 = vpop.f32.mrf.mxu0
      %v1482 = vadd.f32 0.0, %v1481
      %1483 = vmatmul.f32.gmra.mxu0 %v1372
      %v1484 = vpop.f32.mrf.mxu0
      %v1485 = vadd.f32 0.0, %v1484
      %1486 = vmatmul.f32.gmra.mxu0 %v1375
      %v1487 = vpop.f32.mrf.mxu0
      %v1488 = vadd.f32 0.0, %v1487
      %1489 = vmatmul.f32.gmra.mxu0 %v1378
      %v1490 = vpop.f32.mrf.mxu0
      %v1491 = vadd.f32 0.0, %v1490
      %1492 = vmatmul.f32.gmra.mxu0 %v1381
      %v1493 = vpop.f32.mrf.mxu0
      %v1494 = vadd.f32 0.0, %v1493
      %1495 = vmatmul.f32.gmra.mxu0 %v1384
      %v1496 = vpop.f32.mrf.mxu0
      %v1497 = vadd.f32 0.0, %v1496
      %1498 = vmatmul.f32.gmra.mxu0 %v1387
      %v1499 = vpop.f32.mrf.mxu0
      %v1500 = vadd.f32 0.0, %v1499
      %1501 = vmatmul.f32.gmra.mxu0 %v1390
      %v1502 = vpop.f32.mrf.mxu0
      %v1503 = vadd.f32 0.0, %v1502
      %1504 = vmatmul.f32.gmra.mxu0 %v1393
      %v1505 = vpop.f32.mrf.mxu0
      %v1506 = vadd.f32 0.0, %v1505
      %1507 = vmatmul.f32.gmra.mxu0 %v1396
      %v1508 = vpop.f32.mrf.mxu0
      %v1509 = vadd.f32 0.0, %v1508
      %1510 = vmatmul.f32.gmra.mxu0 %v1399
      %v1511 = vpop.f32.mrf.mxu0
      %v1512 = vadd.f32 0.0, %v1511
      %1513 = vmatmul.f32.gmra.mxu0 %v1402
      %v1514 = vpop.f32.mrf.mxu0
      %v1515 = vadd.f32 0.0, %v1514
      %1516 = vmatmul.f32.gmra.mxu0 %v1405
      %v1517 = vpop.f32.mrf.mxu0
      %v1518 = vadd.f32 0.0, %v1517
      %1519 = vmatmul.f32.gmra.mxu0 %v1408
      %v1520 = vpop.f32.mrf.mxu0
      %v1521 = vadd.f32 0.0, %v1520
      %1522 = vmatmul.f32.gmra.mxu0 %v1411
      %v1523 = vpop.f32.mrf.mxu0
      %v1524 = vadd.f32 0.0, %v1523
      %1525 = vmatmul.f32.gmra.mxu0 %v1414
      %v1526 = vpop.f32.mrf.mxu0
      %v1527 = vadd.f32 0.0, %v1526
      %1528 = vmatmul.f32.gmra.mxu0 %v1417
      %v1529 = vpop.f32.mrf.mxu0
      %v1530 = vadd.f32 0.0, %v1529
      %1531 = vmatmul.f32.gmra.mxu0 %v1420
      %v1532 = vpop.f32.mrf.mxu0
      %v1533 = vadd.f32 0.0, %v1532
      %1534 = vmatmul.f32.gmra.mxu0 %v1423
      %v1535 = vpop.f32.mrf.mxu0
      %v1536 = vadd.f32 0.0, %v1535
      %1537 = vdwg.mxu0
      %v1538 = vadd.f32 %v393, %v1443
      %v1539 = vadd.f32 %v394, %v1446
      %v1540 = vadd.f32 %v395, %v1449
      %v1541 = vadd.f32 %v396, %v1452
      %v1542 = vadd.f32 %v397, %v1455
      %v1543 = vadd.f32 %v398, %v1458
      %v1544 = vadd.f32 %v399, %v1461
      %v1545 = vadd.f32 %v400, %v1464
      %v1546 = vadd.f32 %v401, %v1467
      %v1547 = vadd.f32 %v402, %v1470
      %v1548 = vadd.f32 %v403, %v1473
      %v1549 = vadd.f32 %v404, %v1476
      %v1550 = vadd.f32 %v405, %v1479
      %v1551 = vadd.f32 %v406, %v1482
      %v1552 = vadd.f32 %v407, %v1485
      %v1553 = vadd.f32 %v408, %v1488
      %v1554 = vadd.f32 %v409, %v1491
      %v1555 = vadd.f32 %v410, %v1494
      %v1556 = vadd.f32 %v411, %v1497
      %v1557 = vadd.f32 %v412, %v1500
      %v1558 = vadd.f32 %v413, %v1503
      %v1559 = vadd.f32 %v414, %v1506
      %v1560 = vadd.f32 %v415, %v1509
      %v1561 = vadd.f32 %v416, %v1512
      %v1562 = vadd.f32 %v417, %v1515
      %v1563 = vadd.f32 %v418, %v1518
      %v1564 = vadd.f32 %v419, %v1521
      %v1565 = vadd.f32 %v420, %v1524
      %v1566 = vadd.f32 %v421, %v1527
      %v1567 = vadd.f32 %v422, %v1530
      %v1568 = vadd.f32 %v423, %v1533
      %v1569 = vadd.f32 %v424, %v1536
      %v1570 = vperm.slane %v1040, 0
      %v1571 = vadd.f32 %v1538, %v1570
      %v1572 = vadd.f32 %v1539, %v1570
      %v1573 = vadd.f32 %v1540, %v1570
      %v1574 = vadd.f32 %v1541, %v1570
      %v1575 = vadd.f32 %v1542, %v1570
      %v1576 = vadd.f32 %v1543, %v1570
      %v1577 = vadd.f32 %v1544, %v1570
      %v1578 = vadd.f32 %v1545, %v1570
      %v1579 = vadd.f32 %v1546, %v1570
      %v1580 = vadd.f32 %v1547, %v1570
      %v1581 = vadd.f32 %v1548, %v1570
      %v1582 = vadd.f32 %v1549, %v1570
      %v1583 = vadd.f32 %v1550, %v1570
      %v1584 = vadd.f32 %v1551, %v1570
      %v1585 = vadd.f32 %v1552, %v1570
      %v1586 = vadd.f32 %v1553, %v1570
      %v1587 = vadd.f32 %v1554, %v1570
      %v1588 = vadd.f32 %v1555, %v1570
      %v1589 = vadd.f32 %v1556, %v1570
      %v1590 = vadd.f32 %v1557, %v1570
      %v1591 = vadd.f32 %v1558, %v1570
      %v1592 = vadd.f32 %v1559, %v1570
      %v1593 = vadd.f32 %v1560, %v1570
      %v1594 = vadd.f32 %v1561, %v1570
      %v1595 = vadd.f32 %v1562, %v1570
      %v1596 = vadd.f32 %v1563, %v1570
      %v1597 = vadd.f32 %v1564, %v1570
      %v1598 = vadd.f32 %v1565, %v1570
      %v1599 = vadd.f32 %v1566, %v1570
      %v1600 = vadd.f32 %v1567, %v1570
      %v1601 = vadd.f32 %v1568, %v1570
      %v1602 = vadd.f32 %v1569, %v1570
      %v1603 = vtanh.pop %v1571
      %v1604 = vtanh.pop %v1572
      %v1605 = vtanh.pop %v1573
      %v1606 = vtanh.pop %v1574
      %v1607 = vtanh.pop %v1575
      %v1608 = vtanh.pop %v1576
      %v1609 = vtanh.pop %v1577
      %v1610 = vtanh.pop %v1578
      %v1611 = vtanh.pop %v1579
      %v1612 = vtanh.pop %v1580
      %v1613 = vtanh.pop %v1581
      %v1614 = vtanh.pop %v1582
      %v1615 = vtanh.pop %v1583
      %v1616 = vtanh.pop %v1584
      %v1617 = vtanh.pop %v1585
      %v1618 = vtanh.pop %v1586
      %v1619 = vtanh.pop %v1587
      %v1620 = vtanh.pop %v1588
      %v1621 = vtanh.pop %v1589
      %v1622 = vtanh.pop %v1590
      %v1623 = vtanh.pop %v1591
      %v1624 = vtanh.pop %v1592
      %v1625 = vtanh.pop %v1593
      %v1626 = vtanh.pop %v1594
      %v1627 = vtanh.pop %v1595
      %v1628 = vtanh.pop %v1596
      %v1629 = vtanh.pop %v1597
      %v1630 = vtanh.pop %v1598
      %v1631 = vtanh.pop %v1599
      %v1632 = vtanh.pop %v1600
      %v1633 = vtanh.pop %v1601
      %v1634 = vtanh.pop %v1602
      %v1635 = vld [vmem:[%s1 + $0xa8] sm:$0xff]
      %v1636 = vld [vmem:[%s1 + $0xb0] sm:$0xff]
      %v1637 = vld [vmem:[%s1 + $0xb8] sm:$0xff]
      %v1638 = vld [vmem:[%s1 + $0xc0] sm:$0xff]
      %v1639 = vld [vmem:[%s1 + $0xc8] sm:$0xff]
      %v1640 = vld [vmem:[%s1 + $0xd0] sm:$0xff]
      %v1641 = vld [vmem:[%s1 + $0xd8] sm:$0xff]
      %v1642 = vld [vmem:[%s1 + $0xe0] sm:$0xff]
      %v1643 = vld [vmem:[%s1 + $0xe8] sm:$0x1]
      %v1644 = vperm.slane %v1643, 0
      %v1646 = vsel %vm437, %v1603, 0
      %v1649 = vsel %vm437, %v1604, 0
      %v1652 = vsel %vm437, %v1605, 0
      %v1655 = vsel %vm437, %v1606, 0
      %v1658 = vsel %vm437, %v1607, 0
      %v1661 = vsel %vm437, %v1608, 0
      %v1664 = vsel %vm437, %v1609, 0
      %v1667 = vsel %vm437, %v1610, 0
      %v1670 = vsel %vm437, %v1611, 0
      %v1673 = vsel %vm437, %v1612, 0
      %v1676 = vsel %vm437, %v1613, 0
      %v1679 = vsel %vm437, %v1614, 0
      %v1682 = vsel %vm437, %v1615, 0
      %v1685 = vsel %vm437, %v1616, 0
      %v1688 = vsel %vm437, %v1617, 0
      %v1691 = vsel %vm437, %v1618, 0
      %v1694 = vsel %vm437, %v1619, 0
      %v1697 = vsel %vm437, %v1620, 0
      %v1700 = vsel %vm437, %v1621, 0
      %v1703 = vsel %vm437, %v1622, 0
      %v1706 = vsel %vm437, %v1623, 0
      %v1709 = vsel %vm437, %v1624, 0
      %v1712 = vsel %vm437, %v1625, 0
      %v1715 = vsel %vm437, %v1626, 0
      %v1718 = vsel %vm437, %v1627, 0
      %v1721 = vsel %vm437, %v1628, 0
      %v1724 = vsel %vm437, %v1629, 0
      %v1727 = vsel %vm437, %v1630, 0
      %v1730 = vsel %vm437, %v1631, 0
      %v1733 = vsel %vm437, %v1632, 0
      %v1736 = vsel %vm437, %v1633, 0
      %v1739 = vsel %vm437, %v1634, 0
      %1741 = vmatpush.msra.mxu0 0.0
      %1742 = vmatpush.msra.mxu0 0.0
      %1743 = vmatpush.msra.mxu0 0.0
      %1744 = vmatpush.msra.mxu0 0.0
      %1745 = vmatpush.msra.mxu0 0.0
      %1746 = vmatpush.msra.mxu0 0.0
      %1747 = vmatpush.msra.mxu0 0.0
      %1748 = vmatpush.msra.mxu0 0.0
      %1749 = vmatpush.msra.mxu0 %v1642
      %1750 = vmatpush.msra.mxu0 %v1641
      %1751 = vmatpush.msra.mxu0 %v1640
      %1752 = vmatpush.msra.mxu0 %v1639
      %1753 = vmatpush.msra.mxu0 %v1638
      %1754 = vmatpush.msra.mxu0 %v1637
      %1755 = vmatpush.msra.mxu0 %v1636
      %1756 = vmatpush.msra.mxu0 %v1635
      %1757 = vmatmul.f32.gmra.mxu0 %v1646
      %v1758 = vpop.f32.mrf.mxu0
      %v1759 = vadd.f32 %v1644, %v1758
      %1760 = vmatmul.f32.gmra.mxu0 %v1649
      %v1761 = vpop.f32.mrf.mxu0
      %v1762 = vadd.f32 %v1644, %v1761
      %1763 = vmatmul.f32.gmra.mxu0 %v1652
      %v1764 = vpop.f32.mrf.mxu0
      %v1765 = vadd.f32 %v1644, %v1764
      %1766 = vmatmul.f32.gmra.mxu0 %v1655
      %v1767 = vpop.f32.mrf.mxu0
      %v1768 = vadd.f32 %v1644, %v1767
      %1769 = vmatmul.f32.gmra.mxu0 %v1658
      %v1770 = vpop.f32.mrf.mxu0
      %v1771 = vadd.f32 %v1644, %v1770
      %1772 = vmatmul.f32.gmra.mxu0 %v1661
      %v1773 = vpop.f32.mrf.mxu0
      %v1774 = vadd.f32 %v1644, %v1773
      %1775 = vmatmul.f32.gmra.mxu0 %v1664
      %v1776 = vpop.f32.mrf.mxu0
      %v1777 = vadd.f32 %v1644, %v1776
      %1778 = vmatmul.f32.gmra.mxu0 %v1667
      %v1779 = vpop.f32.mrf.mxu0
      %v1780 = vadd.f32 %v1644, %v1779
      %1781 = vmatmul.f32.gmra.mxu0 %v1670
      %v1782 = vpop.f32.mrf.mxu0
      %v1783 = vadd.f32 %v1644, %v1782
      %1784 = vmatmul.f32.gmra.mxu0 %v1673
      %v1785 = vpop.f32.mrf.mxu0
      %v1786 = vadd.f32 %v1644, %v1785
      %1787 = vmatmul.f32.gmra.mxu0 %v1676
      %v1788 = vpop.f32.mrf.mxu0
      %v1789 = vadd.f32 %v1644, %v1788
      %1790 = vmatmul.f32.gmra.mxu0 %v1679
      %v1791 = vpop.f32.mrf.mxu0
      %v1792 = vadd.f32 %v1644, %v1791
      %1793 = vmatmul.f32.gmra.mxu0 %v1682
      %v1794 = vpop.f32.mrf.mxu0
      %v1795 = vadd.f32 %v1644, %v1794
      %1796 = vmatmul.f32.gmra.mxu0 %v1685
      %v1797 = vpop.f32.mrf.mxu0
      %v1798 = vadd.f32 %v1644, %v1797
      %1799 = vmatmul.f32.gmra.mxu0 %v1688
      %v1800 = vpop.f32.mrf.mxu0
      %v1801 = vadd.f32 %v1644, %v1800
      %1802 = vmatmul.f32.gmra.mxu0 %v1691
      %v1803 = vpop.f32.mrf.mxu0
      %v1804 = vadd.f32 %v1644, %v1803
      %1805 = vmatmul.f32.gmra.mxu0 %v1694
      %v1806 = vpop.f32.mrf.mxu0
      %v1807 = vadd.f32 %v1644, %v1806
      %1808 = vmatmul.f32.gmra.mxu0 %v1697
      %v1809 = vpop.f32.mrf.mxu0
      %v1810 = vadd.f32 %v1644, %v1809
      %1811 = vmatmul.f32.gmra.mxu0 %v1700
      %v1812 = vpop.f32.mrf.mxu0
      %v1813 = vadd.f32 %v1644, %v1812
      %1814 = vmatmul.f32.gmra.mxu0 %v1703
      %v1815 = vpop.f32.mrf.mxu0
      %v1816 = vadd.f32 %v1644, %v1815
      %1817 = vmatmul.f32.gmra.mxu0 %v1706
      %v1818 = vpop.f32.mrf.mxu0
      %v1819 = vadd.f32 %v1644, %v1818
      %1820 = vmatmul.f32.gmra.mxu0 %v1709
      %v1821 = vpop.f32.mrf.mxu0
      %v1822 = vadd.f32 %v1644, %v1821
      %1823 = vmatmul.f32.gmra.mxu0 %v1712
      %v1824 = vpop.f32.mrf.mxu0
      %v1825 = vadd.f32 %v1644, %v1824
      %1826 = vmatmul.f32.gmra.mxu0 %v1715
      %v1827 = vpop.f32.mrf.mxu0
      %v1828 = vadd.f32 %v1644, %v1827
      %1829 = vmatmul.f32.gmra.mxu0 %v1718
      %v1830 = vpop.f32.mrf.mxu0
      %v1831 = vadd.f32 %v1644, %v1830
      %1832 = vmatmul.f32.gmra.mxu0 %v1721
      %v1833 = vpop.f32.mrf.mxu0
      %v1834 = vadd.f32 %v1644, %v1833
      %1835 = vmatmul.f32.gmra.mxu0 %v1724
      %v1836 = vpop.f32.mrf.mxu0
      %v1837 = vadd.f32 %v1644, %v1836
      %1838 = vmatmul.f32.gmra.mxu0 %v1727
      %v1839 = vpop.f32.mrf.mxu0
      %v1840 = vadd.f32 %v1644, %v1839
      %1841 = vmatmul.f32.gmra.mxu0 %v1730
      %v1842 = vpop.f32.mrf.mxu0
      %v1843 = vadd.f32 %v1644, %v1842
      %1844 = vmatmul.f32.gmra.mxu0 %v1733
      %v1845 = vpop.f32.mrf.mxu0
      %v1846 = vadd.f32 %v1644, %v1845
      %1847 = vmatmul.f32.gmra.mxu0 %v1736
      %v1848 = vpop.f32.mrf.mxu0
      %v1849 = vadd.f32 %v1644, %v1848
      %1850 = vmatmul.f32.gmra.mxu0 %v1739
      %v1851 = vpop.f32.mrf.mxu0
      %v1852 = vadd.f32 %v1644, %v1851
      %1853 = vdwg.mxu0
      %vm1854 = vcmp.lt.s32.totalorder %v426, 5
      %v1855 = vsel %vm1854, %v1759, -inf
      %v1856 = vsel %vm1854, %v1762, -inf
      %v1857 = vsel %vm1854, %v1765, -inf
      %v1858 = vsel %vm1854, %v1768, -inf
      %v1859 = vsel %vm1854, %v1771, -inf
      %v1860 = vsel %vm1854, %v1774, -inf
      %v1861 = vsel %vm1854, %v1777, -inf
      %v1862 = vsel %vm1854, %v1780, -inf
      %v1863 = vsel %vm1854, %v1783, -inf
      %v1864 = vsel %vm1854, %v1786, -inf
      %v1865 = vsel %vm1854, %v1789, -inf
      %v1866 = vsel %vm1854, %v1792, -inf
      %v1867 = vsel %vm1854, %v1795, -inf
      %v1868 = vsel %vm1854, %v1798, -inf
      %v1869 = vsel %vm1854, %v1801, -inf
      %v1870 = vsel %vm1854, %v1804, -inf
      %v1871 = vsel %vm1854, %v1807, -inf
      %v1872 = vsel %vm1854, %v1810, -inf
      %v1873 = vsel %vm1854, %v1813, -inf
      %v1874 = vsel %vm1854, %v1816, -inf
      %v1875 = vsel %vm1854, %v1819, -inf
      %v1876 = vsel %vm1854, %v1822, -inf
      %v1877 = vsel %vm1854, %v1825, -inf
      %v1878 = vsel %vm1854, %v1828, -inf
      %v1879 = vsel %vm1854, %v1831, -inf
      %v1880 = vsel %vm1854, %v1834, -inf
      %v1881 = vsel %vm1854, %v1837, -inf
      %v1882 = vsel %vm1854, %v1840, -inf
      %v1883 = vsel %vm1854, %v1843, -inf
      %v1884 = vsel %vm1854, %v1846, -inf
      %v1885 = vsel %vm1854, %v1849, -inf
      %v1886 = vsel %vm1854, %v1852, -inf
      %vm1887 = vcmask 64512
      %v1888 = vsel %vm1887, %v1855, -inf
      %1889 = vmax.xlane.f32.xlu0 %v1888
      %v1890 = vpop.xlane.xlu0 %1889
      %v1891 = vsel %vm1887, %v1856, -inf
      %1892 = vmax.xlane.f32.xlu0 %v1891
      %v1893 = vpop.xlane.xlu0 %1892
      %v1894 = vsel %vm1887, %v1857, -inf
      %1895 = vmax.xlane.f32.xlu0 %v1894
      %v1896 = vpop.xlane.xlu0 %1895
      %v1897 = vsel %vm1887, %v1858, -inf
      %1898 = vmax.xlane.f32.xlu0 %v1897
      %v1899 = vpop.xlane.xlu0 %1898
      %v1900 = vsel %vm1887, %v1859, -inf
      %1901 = vmax.xlane.f32.xlu0 %v1900
      %v1902 = vpop.xlane.xlu0 %1901
      %v1903 = vsel %vm1887, %v1860, -inf
      %1904 = vmax.xlane.f32.xlu0 %v1903
      %v1905 = vpop.xlane.xlu0 %1904
      %v1906 = vsel %vm1887, %v1861, -inf
      %1907 = vmax.xlane.f32.xlu0 %v1906
      %v1908 = vpop.xlane.xlu0 %1907
      %v1909 = vsel %vm1887, %v1862, -inf
      %1910 = vmax.xlane.f32.xlu0 %v1909
      %v1911 = vpop.xlane.xlu0 %1910
      %v1912 = vsel %vm1887, %v1863, -inf
      %1913 = vmax.xlane.f32.xlu0 %v1912
      %v1914 = vpop.xlane.xlu0 %1913
      %v1915 = vsel %vm1887, %v1864, -inf
      %1916 = vmax.xlane.f32.xlu0 %v1915
      %v1917 = vpop.xlane.xlu0 %1916
      %v1918 = vsel %vm1887, %v1865, -inf
      %1919 = vmax.xlane.f32.xlu0 %v1918
      %v1920 = vpop.xlane.xlu0 %1919
      %v1921 = vsel %vm1887, %v1866, -inf
      %1922 = vmax.xlane.f32.xlu0 %v1921
      %v1923 = vpop.xlane.xlu0 %1922
      %v1924 = vsel %vm1887, %v1867, -inf
      %1925 = vmax.xlane.f32.xlu0 %v1924
      %v1926 = vpop.xlane.xlu0 %1925
      %v1927 = vsel %vm1887, %v1868, -inf
      %1928 = vmax.xlane.f32.xlu0 %v1927
      %v1929 = vpop.xlane.xlu0 %1928
      %v1930 = vsel %vm1887, %v1869, -inf
      %1931 = vmax.xlane.f32.xlu0 %v1930
      %v1932 = vpop.xlane.xlu0 %1931
      %v1933 = vsel %vm1887, %v1870, -inf
      %1934 = vmax.xlane.f32.xlu0 %v1933
      %v1935 = vpop.xlane.xlu0 %1934
      %v1936 = vsel %vm1887, %v1871, -inf
      %1937 = vmax.xlane.f32.xlu0 %v1936
      %v1938 = vpop.xlane.xlu0 %1937
      %v1939 = vsel %vm1887, %v1872, -inf
      %1940 = vmax.xlane.f32.xlu0 %v1939
      %v1941 = vpop.xlane.xlu0 %1940
      %v1942 = vsel %vm1887, %v1873, -inf
      %1943 = vmax.xlane.f32.xlu0 %v1942
      %v1944 = vpop.xlane.xlu0 %1943
      %v1945 = vsel %vm1887, %v1874, -inf
      %1946 = vmax.xlane.f32.xlu0 %v1945
      %v1947 = vpop.xlane.xlu0 %1946
      %v1948 = vsel %vm1887, %v1875, -inf
      %1949 = vmax.xlane.f32.xlu0 %v1948
      %v1950 = vpop.xlane.xlu0 %1949
      %v1951 = vsel %vm1887, %v1876, -inf
      %1952 = vmax.xlane.f32.xlu0 %v1951
      %v1953 = vpop.xlane.xlu0 %1952
      %v1954 = vsel %vm1887, %v1877, -inf
      %1955 = vmax.xlane.f32.xlu0 %v1954
      %v1956 = vpop.xlane.xlu0 %1955
      %v1957 = vsel %vm1887, %v1878, -inf
      %1958 = vmax.xlane.f32.xlu0 %v1957
      %v1959 = vpop.xlane.xlu0 %1958
      %v1960 = vsel %vm1887, %v1879, -inf
      %1961 = vmax.xlane.f32.xlu0 %v1960
      %v1962 = vpop.xlane.xlu0 %1961
      %v1963 = vsel %vm1887, %v1880, -inf
      %1964 = vmax.xlane.f32.xlu0 %v1963
      %v1965 = vpop.xlane.xlu0 %1964
      %v1966 = vsel %vm1887, %v1881, -inf
      %1967 = vmax.xlane.f32.xlu0 %v1966
      %v1968 = vpop.xlane.xlu0 %1967
      %v1969 = vsel %vm1887, %v1882, -inf
      %1970 = vmax.xlane.f32.xlu0 %v1969
      %v1971 = vpop.xlane.xlu0 %1970
      %v1972 = vsel %vm1887, %v1883, -inf
      %1973 = vmax.xlane.f32.xlu0 %v1972
      %v1974 = vpop.xlane.xlu0 %1973
      %v1975 = vsel %vm1887, %v1884, -inf
      %1976 = vmax.xlane.f32.xlu0 %v1975
      %v1977 = vpop.xlane.xlu0 %1976
      %v1978 = vsel %vm1887, %v1885, -inf
      %1979 = vmax.xlane.f32.xlu0 %v1978
      %v1980 = vpop.xlane.xlu0 %1979
      %v1981 = vsel %vm1887, %v1886, -inf
      %1982 = vmax.xlane.f32.xlu0 %v1981
      %v1983 = vpop.xlane.xlu0 %1982
      %v1984 = vsub.f32 %v1759, %v1890
      %v1985 = vsub.f32 %v1762, %v1893
      %v1986 = vsub.f32 %v1765, %v1896
      %v1987 = vsub.f32 %v1768, %v1899
      %v1988 = vsub.f32 %v1771, %v1902
      %v1989 = vsub.f32 %v1774, %v1905
      %v1990 = vsub.f32 %v1777, %v1908
      %v1991 = vsub.f32 %v1780, %v1911
      %v1992 = vsub.f32 %v1783, %v1914
      %v1993 = vsub.f32 %v1786, %v1917
      %v1994 = vsub.f32 %v1789, %v1920
      %v1995 = vsub.f32 %v1792, %v1923
      %v1996 = vsub.f32 %v1795, %v1926
      %v1997 = vsub.f32 %v1798, %v1929
      %v1998 = vsub.f32 %v1801, %v1932
      %v1999 = vsub.f32 %v1804, %v1935
      %v2000 = vsub.f32 %v1807, %v1938
      %v2001 = vsub.f32 %v1810, %v1941
      %v2002 = vsub.f32 %v1813, %v1944
      %v2003 = vsub.f32 %v1816, %v1947
      %v2004 = vsub.f32 %v1819, %v1950
      %v2005 = vsub.f32 %v1822, %v1953
      %v2006 = vsub.f32 %v1825, %v1956
      %v2007 = vsub.f32 %v1828, %v1959
      %v2008 = vsub.f32 %v1831, %v1962
      %v2009 = vsub.f32 %v1834, %v1965
      %v2010 = vsub.f32 %v1837, %v1968
      %v2011 = vsub.f32 %v1840, %v1971
      %v2012 = vsub.f32 %v1843, %v1974
      %v2013 = vsub.f32 %v1846, %v1977
      %v2014 = vsub.f32 %v1849, %v1980
      %v2015 = vsub.f32 %v1852, %v1983
      %v2016 = vsel %vm1854, %v1984, -1e+30
      %v2017 = vsel %vm1854, %v1985, -1e+30
      %v2018 = vsel %vm1854, %v1986, -1e+30
      %v2019 = vsel %vm1854, %v1987, -1e+30
      %v2020 = vsel %vm1854, %v1988, -1e+30
      %v2021 = vsel %vm1854, %v1989, -1e+30
      %v2022 = vsel %vm1854, %v1990, -1e+30
      %v2023 = vsel %vm1854, %v1991, -1e+30
      %v2024 = vsel %vm1854, %v1992, -1e+30
      %v2025 = vsel %vm1854, %v1993, -1e+30
      %v2026 = vsel %vm1854, %v1994, -1e+30
      %v2027 = vsel %vm1854, %v1995, -1e+30
      %v2028 = vsel %vm1854, %v1996, -1e+30
      %v2029 = vsel %vm1854, %v1997, -1e+30
      %v2030 = vsel %vm1854, %v1998, -1e+30
      %v2031 = vsel %vm1854, %v1999, -1e+30
      %v2032 = vsel %vm1854, %v2000, -1e+30
      %v2033 = vsel %vm1854, %v2001, -1e+30
      %v2034 = vsel %vm1854, %v2002, -1e+30
      %v2035 = vsel %vm1854, %v2003, -1e+30
      %v2036 = vsel %vm1854, %v2004, -1e+30
      %v2037 = vsel %vm1854, %v2005, -1e+30
      %v2038 = vsel %vm1854, %v2006, -1e+30
      %v2039 = vsel %vm1854, %v2007, -1e+30
      %v2040 = vsel %vm1854, %v2008, -1e+30
      %v2041 = vsel %vm1854, %v2009, -1e+30
      %v2042 = vsel %vm1854, %v2010, -1e+30
      %v2043 = vsel %vm1854, %v2011, -1e+30
      %v2044 = vsel %vm1854, %v2012, -1e+30
      %v2045 = vsel %vm1854, %v2013, -1e+30
      %v2046 = vsel %vm1854, %v2014, -1e+30
      %v2047 = vsel %vm1854, %v2015, -1e+30
      %v2048 = vmul.f32 %v2016, 1.442695
      %v2049 = vpow.pop %v2048
      %v2050 = vmul.f32 %v2017, 1.442695
      %v2051 = vpow.pop %v2050
      %v2052 = vmul.f32 %v2018, 1.442695
      %v2053 = vpow.pop %v2052
      %v2054 = vmul.f32 %v2019, 1.442695
      %v2055 = vpow.pop %v2054
      %v2056 = vmul.f32 %v2020, 1.442695
      %v2057 = vpow.pop %v2056
      %v2058 = vmul.f32 %v2021, 1.442695
      %v2059 = vpow.pop %v2058
      %v2060 = vmul.f32 %v2022, 1.442695
      %v2061 = vpow.pop %v2060
      %v2062 = vmul.f32 %v2023, 1.442695
      %v2063 = vpow.pop %v2062
      %v2064 = vmul.f32 %v2024, 1.442695
      %v2065 = vpow.pop %v2064
      %v2066 = vmul.f32 %v2025, 1.442695
      %v2067 = vpow.pop %v2066
      %v2068 = vmul.f32 %v2026, 1.442695
      %v2069 = vpow.pop %v2068
      %v2070 = vmul.f32 %v2027, 1.442695
      %v2071 = vpow.pop %v2070
      %v2072 = vmul.f32 %v2028, 1.442695
      %v2073 = vpow.pop %v2072
      %v2074 = vmul.f32 %v2029, 1.442695
      %v2075 = vpow.pop %v2074
      %v2076 = vmul.f32 %v2030, 1.442695
      %v2077 = vpow.pop %v2076
      %v2078 = vmul.f32 %v2031, 1.442695
      %v2079 = vpow.pop %v2078
      %v2080 = vmul.f32 %v2032, 1.442695
      %v2081 = vpow.pop %v2080
      %v2082 = vmul.f32 %v2033, 1.442695
      %v2083 = vpow.pop %v2082
      %v2084 = vmul.f32 %v2034, 1.442695
      %v2085 = vpow.pop %v2084
      %v2086 = vmul.f32 %v2035, 1.442695
      %v2087 = vpow.pop %v2086
      %v2088 = vmul.f32 %v2036, 1.442695
      %v2089 = vpow.pop %v2088
      %v2090 = vmul.f32 %v2037, 1.442695
      %v2091 = vpow.pop %v2090
      %v2092 = vmul.f32 %v2038, 1.442695
      %v2093 = vpow.pop %v2092
      %v2094 = vmul.f32 %v2039, 1.442695
      %v2095 = vpow.pop %v2094
      %v2096 = vmul.f32 %v2040, 1.442695
      %v2097 = vpow.pop %v2096
      %v2098 = vmul.f32 %v2041, 1.442695
      %v2099 = vpow.pop %v2098
      %v2100 = vmul.f32 %v2042, 1.442695
      %v2101 = vpow.pop %v2100
      %v2102 = vmul.f32 %v2043, 1.442695
      %v2103 = vpow.pop %v2102
      %v2104 = vmul.f32 %v2044, 1.442695
      %v2105 = vpow.pop %v2104
      %v2106 = vmul.f32 %v2045, 1.442695
      %v2107 = vpow.pop %v2106
      %v2108 = vmul.f32 %v2046, 1.442695
      %v2109 = vpow.pop %v2108
      %v2110 = vmul.f32 %v2047, 1.442695
      %v2111 = vpow.pop %v2110
      %v2112 = vsel %vm1887, %v2049, 0.0
      %2113 = vadd.xlane.f32.xlu0 %v2112
      %v2114 = vpop.xlane.xlu0 %2113
      %v2115 = vsel %vm1887, %v2051, 0.0
      %2116 = vadd.xlane.f32.xlu0 %v2115
      %v2117 = vpop.xlane.xlu0 %2116
      %v2118 = vsel %vm1887, %v2053, 0.0
      %2119 = vadd.xlane.f32.xlu0 %v2118
      %v2120 = vpop.xlane.xlu0 %2119
      %v2121 = vsel %vm1887, %v2055, 0.0
      %2122 = vadd.xlane.f32.xlu0 %v2121
      %v2123 = vpop.xlane.xlu0 %2122
      %v2124 = vsel %vm1887, %v2057, 0.0
      %2125 = vadd.xlane.f32.xlu0 %v2124
      %v2126 = vpop.xlane.xlu0 %2125
      %v2127 = vsel %vm1887, %v2059, 0.0
      %2128 = vadd.xlane.f32.xlu0 %v2127
      %v2129 = vpop.xlane.xlu0 %2128
      %v2130 = vsel %vm1887, %v2061, 0.0
      %2131 = vadd.xlane.f32.xlu0 %v2130
      %v2132 = vpop.xlane.xlu0 %2131
      %v2133 = vsel %vm1887, %v2063, 0.0
      %2134 = vadd.xlane.f32.xlu0 %v2133
      %v2135 = vpop.xlane.xlu0 %2134
      %v2136 = vsel %vm1887, %v2065, 0.0
      %2137 = vadd.xlane.f32.xlu0 %v2136
      %v2138 = vpop.xlane.xlu0 %2137
      %v2139 = vsel %vm1887, %v2067, 0.0
      %2140 = vadd.xlane.f32.xlu0 %v2139
      %v2141 = vpop.xlane.xlu0 %2140
      %v2142 = vsel %vm1887, %v2069, 0.0
      %2143 = vadd.xlane.f32.xlu0 %v2142
      %v2144 = vpop.xlane.xlu0 %2143
      %v2145 = vsel %vm1887, %v2071, 0.0
      %2146 = vadd.xlane.f32.xlu0 %v2145
      %v2147 = vpop.xlane.xlu0 %2146
      %v2148 = vsel %vm1887, %v2073, 0.0
      %2149 = vadd.xlane.f32.xlu0 %v2148
      %v2150 = vpop.xlane.xlu0 %2149
      %v2151 = vsel %vm1887, %v2075, 0.0
      %2152 = vadd.xlane.f32.xlu0 %v2151
      %v2153 = vpop.xlane.xlu0 %2152
      %v2154 = vsel %vm1887, %v2077, 0.0
      %2155 = vadd.xlane.f32.xlu0 %v2154
      %v2156 = vpop.xlane.xlu0 %2155
      %v2157 = vsel %vm1887, %v2079, 0.0
      %2158 = vadd.xlane.f32.xlu0 %v2157
      %v2159 = vpop.xlane.xlu0 %2158
      %v2160 = vsel %vm1887, %v2081, 0.0
      %2161 = vadd.xlane.f32.xlu0 %v2160
      %v2162 = vpop.xlane.xlu0 %2161
      %v2163 = vsel %vm1887, %v2083, 0.0
      %2164 = vadd.xlane.f32.xlu0 %v2163
      %v2165 = vpop.xlane.xlu0 %2164
      %v2166 = vsel %vm1887, %v2085, 0.0
      %2167 = vadd.xlane.f32.xlu0 %v2166
      %v2168 = vpop.xlane.xlu0 %2167
      %v2169 = vsel %vm1887, %v2087, 0.0
      %2170 = vadd.xlane.f32.xlu0 %v2169
      %v2171 = vpop.xlane.xlu0 %2170
      %v2172 = vsel %vm1887, %v2089, 0.0
      %2173 = vadd.xlane.f32.xlu0 %v2172
      %v2174 = vpop.xlane.xlu0 %2173
      %v2175 = vsel %vm1887, %v2091, 0.0
      %2176 = vadd.xlane.f32.xlu0 %v2175
      %v2177 = vpop.xlane.xlu0 %2176
      %v2178 = vsel %vm1887, %v2093, 0.0
      %2179 = vadd.xlane.f32.xlu0 %v2178
      %v2180 = vpop.xlane.xlu0 %2179
      %v2181 = vsel %vm1887, %v2095, 0.0
      %2182 = vadd.xlane.f32.xlu0 %v2181
      %v2183 = vpop.xlane.xlu0 %2182
      %v2184 = vsel %vm1887, %v2097, 0.0
      %2185 = vadd.xlane.f32.xlu0 %v2184
      %v2186 = vpop.xlane.xlu0 %2185
      %v2187 = vsel %vm1887, %v2099, 0.0
      %2188 = vadd.xlane.f32.xlu0 %v2187
      %v2189 = vpop.xlane.xlu0 %2188
      %v2190 = vsel %vm1887, %v2101, 0.0
      %2191 = vadd.xlane.f32.xlu0 %v2190
      %v2192 = vpop.xlane.xlu0 %2191
      %v2193 = vsel %vm1887, %v2103, 0.0
      %2194 = vadd.xlane.f32.xlu0 %v2193
      %v2195 = vpop.xlane.xlu0 %2194
      %v2196 = vsel %vm1887, %v2105, 0.0
      %2197 = vadd.xlane.f32.xlu0 %v2196
      %v2198 = vpop.xlane.xlu0 %2197
      %v2199 = vsel %vm1887, %v2107, 0.0
      %2200 = vadd.xlane.f32.xlu0 %v2199
      %v2201 = vpop.xlane.xlu0 %2200
      %v2202 = vsel %vm1887, %v2109, 0.0
      %2203 = vadd.xlane.f32.xlu0 %v2202
      %v2204 = vpop.xlane.xlu0 %2203
      %v2205 = vsel %vm1887, %v2111, 0.0
      %2206 = vadd.xlane.f32.xlu0 %v2205
      %v2207 = vpop.xlane.xlu0 %2206
      %v2208 = vlog2.pop %v2114
      %v2209 = vmul.f32 %v2208, 0.6931472
      %v2210 = vlog2.pop %v2117
      %v2211 = vmul.f32 %v2210, 0.6931472
      %v2212 = vlog2.pop %v2120
      %v2213 = vmul.f32 %v2212, 0.6931472
      %v2214 = vlog2.pop %v2123
      %v2215 = vmul.f32 %v2214, 0.6931472
      %v2216 = vlog2.pop %v2126
      %v2217 = vmul.f32 %v2216, 0.6931472
      %v2218 = vlog2.pop %v2129
      %v2219 = vmul.f32 %v2218, 0.6931472
      %v2220 = vlog2.pop %v2132
      %v2221 = vmul.f32 %v2220, 0.6931472
      %v2222 = vlog2.pop %v2135
      %v2223 = vmul.f32 %v2222, 0.6931472
      %v2224 = vlog2.pop %v2138
      %v2225 = vmul.f32 %v2224, 0.6931472
      %v2226 = vlog2.pop %v2141
      %v2227 = vmul.f32 %v2226, 0.6931472
      %v2228 = vlog2.pop %v2144
      %v2229 = vmul.f32 %v2228, 0.6931472
      %v2230 = vlog2.pop %v2147
      %v2231 = vmul.f32 %v2230, 0.6931472
      %v2232 = vlog2.pop %v2150
      %v2233 = vmul.f32 %v2232, 0.6931472
      %v2234 = vlog2.pop %v2153
      %v2235 = vmul.f32 %v2234, 0.6931472
      %v2236 = vlog2.pop %v2156
      %v2237 = vmul.f32 %v2236, 0.6931472
      %v2238 = vlog2.pop %v2159
      %v2239 = vmul.f32 %v2238, 0.6931472
      %v2240 = vlog2.pop %v2162
      %v2241 = vmul.f32 %v2240, 0.6931472
      %v2242 = vlog2.pop %v2165
      %v2243 = vmul.f32 %v2242, 0.6931472
      %v2244 = vlog2.pop %v2168
      %v2245 = vmul.f32 %v2244, 0.6931472
      %v2246 = vlog2.pop %v2171
      %v2247 = vmul.f32 %v2246, 0.6931472
      %v2248 = vlog2.pop %v2174
      %v2249 = vmul.f32 %v2248, 0.6931472
      %v2250 = vlog2.pop %v2177
      %v2251 = vmul.f32 %v2250, 0.6931472
      %v2252 = vlog2.pop %v2180
      %v2253 = vmul.f32 %v2252, 0.6931472
      %v2254 = vlog2.pop %v2183
      %v2255 = vmul.f32 %v2254, 0.6931472
      %v2256 = vlog2.pop %v2186
      %v2257 = vmul.f32 %v2256, 0.6931472
      %v2258 = vlog2.pop %v2189
      %v2259 = vmul.f32 %v2258, 0.6931472
      %v2260 = vlog2.pop %v2192
      %v2261 = vmul.f32 %v2260, 0.6931472
      %v2262 = vlog2.pop %v2195
      %v2263 = vmul.f32 %v2262, 0.6931472
      %v2264 = vlog2.pop %v2198
      %v2265 = vmul.f32 %v2264, 0.6931472
      %v2266 = vlog2.pop %v2201
      %v2267 = vmul.f32 %v2266, 0.6931472
      %v2268 = vlog2.pop %v2204
      %v2269 = vmul.f32 %v2268, 0.6931472
      %v2270 = vlog2.pop %v2207
      %v2271 = vmul.f32 %v2270, 0.6931472
      %v2272 = vadd.f32 %v1890, %v2209
      %v2273 = vadd.f32 %v1893, %v2211
      %v2274 = vadd.f32 %v1896, %v2213
      %v2275 = vadd.f32 %v1899, %v2215
      %v2276 = vadd.f32 %v1902, %v2217
      %v2277 = vadd.f32 %v1905, %v2219
      %v2278 = vadd.f32 %v1908, %v2221
      %v2279 = vadd.f32 %v1911, %v2223
      %v2280 = vadd.f32 %v1914, %v2225
      %v2281 = vadd.f32 %v1917, %v2227
      %v2282 = vadd.f32 %v1920, %v2229
      %v2283 = vadd.f32 %v1923, %v2231
      %v2284 = vadd.f32 %v1926, %v2233
      %v2285 = vadd.f32 %v1929, %v2235
      %v2286 = vadd.f32 %v1932, %v2237
      %v2287 = vadd.f32 %v1935, %v2239
      %v2288 = vadd.f32 %v1938, %v2241
      %v2289 = vadd.f32 %v1941, %v2243
      %v2290 = vadd.f32 %v1944, %v2245
      %v2291 = vadd.f32 %v1947, %v2247
      %v2292 = vadd.f32 %v1950, %v2249
      %v2293 = vadd.f32 %v1953, %v2251
      %v2294 = vadd.f32 %v1956, %v2253
      %v2295 = vadd.f32 %v1959, %v2255
      %v2296 = vadd.f32 %v1962, %v2257
      %v2297 = vadd.f32 %v1965, %v2259
      %v2298 = vadd.f32 %v1968, %v2261
      %v2299 = vadd.f32 %v1971, %v2263
      %v2300 = vadd.f32 %v1974, %v2265
      %v2301 = vadd.f32 %v1977, %v2267
      %v2302 = vadd.f32 %v1980, %v2269
      %v2303 = vadd.f32 %v1983, %v2271
      %v2304 = vsub.f32 %v1759, %v2272
      %v2305 = vsub.f32 %v1762, %v2273
      %v2306 = vsub.f32 %v1765, %v2274
      %v2307 = vsub.f32 %v1768, %v2275
      %v2308 = vsub.f32 %v1771, %v2276
      %v2309 = vsub.f32 %v1774, %v2277
      %v2310 = vsub.f32 %v1777, %v2278
      %v2311 = vsub.f32 %v1780, %v2279
      %v2312 = vsub.f32 %v1783, %v2280
      %v2313 = vsub.f32 %v1786, %v2281
      %v2314 = vsub.f32 %v1789, %v2282
      %v2315 = vsub.f32 %v1792, %v2283
      %v2316 = vsub.f32 %v1795, %v2284
      %v2317 = vsub.f32 %v1798, %v2285
      %v2318 = vsub.f32 %v1801, %v2286
      %v2319 = vsub.f32 %v1804, %v2287
      %v2320 = vsub.f32 %v1807, %v2288
      %v2321 = vsub.f32 %v1810, %v2289
      %v2322 = vsub.f32 %v1813, %v2290
      %v2323 = vsub.f32 %v1816, %v2291
      %v2324 = vsub.f32 %v1819, %v2292
      %v2325 = vsub.f32 %v1822, %v2293
      %v2326 = vsub.f32 %v1825, %v2294
      %v2327 = vsub.f32 %v1828, %v2295
      %v2328 = vsub.f32 %v1831, %v2296
      %v2329 = vsub.f32 %v1834, %v2297
      %v2330 = vsub.f32 %v1837, %v2298
      %v2331 = vsub.f32 %v1840, %v2299
      %v2332 = vsub.f32 %v1843, %v2300
      %v2333 = vsub.f32 %v1846, %v2301
      %v2334 = vsub.f32 %v1849, %v2302
      %v2335 = vsub.f32 %v1852, %v2303
      %v2336 = vsel %vm1854, %v2304, %v1759
      %v2337 = vsel %vm1854, %v2305, %v1762
      %v2338 = vsel %vm1854, %v2306, %v1765
      %v2339 = vsel %vm1854, %v2307, %v1768
      %v2340 = vsel %vm1854, %v2308, %v1771
      %v2341 = vsel %vm1854, %v2309, %v1774
      %v2342 = vsel %vm1854, %v2310, %v1777
      %v2343 = vsel %vm1854, %v2311, %v1780
      %v2344 = vsel %vm1854, %v2312, %v1783
      %v2345 = vsel %vm1854, %v2313, %v1786
      %v2346 = vsel %vm1854, %v2314, %v1789
      %v2347 = vsel %vm1854, %v2315, %v1792
      %v2348 = vsel %vm1854, %v2316, %v1795
      %v2349 = vsel %vm1854, %v2317, %v1798
      %v2350 = vsel %vm1854, %v2318, %v1801
      %v2351 = vsel %vm1854, %v2319, %v1804
      %v2352 = vsel %vm1854, %v2320, %v1807
      %v2353 = vsel %vm1854, %v2321, %v1810
      %v2354 = vsel %vm1854, %v2322, %v1813
      %v2355 = vsel %vm1854, %v2323, %v1816
      %v2356 = vsel %vm1854, %v2324, %v1819
      %v2357 = vsel %vm1854, %v2325, %v1822
      %v2358 = vsel %vm1854, %v2326, %v1825
      %v2359 = vsel %vm1854, %v2327, %v1828
      %v2360 = vsel %vm1854, %v2328, %v1831
      %v2361 = vsel %vm1854, %v2329, %v1834
      %v2362 = vsel %vm1854, %v2330, %v1837
      %v2363 = vsel %vm1854, %v2331, %v1840
      %v2364 = vsel %vm1854, %v2332, %v1843
      %v2365 = vsel %vm1854, %v2333, %v1846
      %v2366 = vsel %vm1854, %v2334, %v1849
      %v2367 = vsel %vm1854, %v2335, %v1852
      %2368 = vst.msk [vmem:[%s145] sm:$0xff] %vm1887, %v2336
      %2369 = vst.msk [vmem:[%s145 + $0x8] sm:$0xff] %vm1887, %v2337
      %2370 = vst.msk [vmem:[%s145 + $0x10] sm:$0xff] %vm1887, %v2338
      %2371 = vst.msk [vmem:[%s145 + $0x18] sm:$0xff] %vm1887, %v2339
      %2372 = vst.msk [vmem:[%s145 + $0x20] sm:$0xff] %vm1887, %v2340
      %2373 = vst.msk [vmem:[%s145 + $0x28] sm:$0xff] %vm1887, %v2341
      %2374 = vst.msk [vmem:[%s145 + $0x30] sm:$0xff] %vm1887, %v2342
      %2375 = vst.msk [vmem:[%s145 + $0x38] sm:$0xff] %vm1887, %v2343
      %2376 = vst.msk [vmem:[%s145 + $0x40] sm:$0xff] %vm1887, %v2344
      %2377 = vst.msk [vmem:[%s145 + $0x48] sm:$0xff] %vm1887, %v2345
      %2378 = vst.msk [vmem:[%s145 + $0x50] sm:$0xff] %vm1887, %v2346
      %2379 = vst.msk [vmem:[%s145 + $0x58] sm:$0xff] %vm1887, %v2347
      %2380 = vst.msk [vmem:[%s145 + $0x60] sm:$0xff] %vm1887, %v2348
      %2381 = vst.msk [vmem:[%s145 + $0x68] sm:$0xff] %vm1887, %v2349
      %2382 = vst.msk [vmem:[%s145 + $0x70] sm:$0xff] %vm1887, %v2350
      %2383 = vst.msk [vmem:[%s145 + $0x78] sm:$0xff] %vm1887, %v2351
      %2384 = vst.msk [vmem:[%s145 + $0x80] sm:$0xff] %vm1887, %v2352
      %2385 = vst.msk [vmem:[%s145 + $0x88] sm:$0xff] %vm1887, %v2353
      %2386 = vst.msk [vmem:[%s145 + $0x90] sm:$0xff] %vm1887, %v2354
      %2387 = vst.msk [vmem:[%s145 + $0x98] sm:$0xff] %vm1887, %v2355
      %2388 = vst.msk [vmem:[%s145 + $0xa0] sm:$0xff] %vm1887, %v2356
      %2389 = vst.msk [vmem:[%s145 + $0xa8] sm:$0xff] %vm1887, %v2357
      %2390 = vst.msk [vmem:[%s145 + $0xb0] sm:$0xff] %vm1887, %v2358
      %2391 = vst.msk [vmem:[%s145 + $0xb8] sm:$0xff] %vm1887, %v2359
      %2392 = vst.msk [vmem:[%s145 + $0xc0] sm:$0xff] %vm1887, %v2360
      %2393 = vst.msk [vmem:[%s145 + $0xc8] sm:$0xff] %vm1887, %v2361
      %2394 = vst.msk [vmem:[%s145 + $0xd0] sm:$0xff] %vm1887, %v2362
      %2395 = vst.msk [vmem:[%s145 + $0xd8] sm:$0xff] %vm1887, %v2363
      %2396 = vst.msk [vmem:[%s145 + $0xe0] sm:$0xff] %vm1887, %v2364
      %2397 = vst.msk [vmem:[%s145 + $0xe8] sm:$0xff] %vm1887, %v2365
      %2398 = vst.msk [vmem:[%s145 + $0xf0] sm:$0xff] %vm1887, %v2366
      %2399 = vst.msk [vmem:[%s145 + $0xf8] sm:$0xff] %vm1887, %v2367
      %s2400 = smul.u32 32, %s13
      %p2401 = scmp.lt.s32.totalorder %s2400, 63
      %s2402 = scalar_select %p2401, %s2400, 63
      %s2403 = smul.addr %s2402, 8
      %s2404 = scalar_lea.vmem %s2, %s2403
      // Predicated region
      $region29: #{commnet_forward.1} parent=27 // pred_check
        %p2405 = pneg %p78
      $region30: #{commnet_forward.1} parent=27 // pred_check_branch
        %2407 = sbr.rel (%p2405) target = $region32
      $region31: #{commnet_forward.1} parent=27 // pred_region
        %s2408 = smul.u32 32, %s13
      $region32: #{commnet_forward.1} parent=27 // pred_fallthru
        _
    $region28: #{commnet_forward.1} parent=5 // pred_fallthru
      _
    %p2409 = scmp.le.s32.totalorder 2, %s8
    // Predicated region
    $region33: #{commnet_forward.1} parent=5 // pred_check
      %p2410 = pneg %p2409
    $region34: #{commnet_forward.1} parent=5 // pred_check_branch
      %2412 = sbr.rel (%p2410) target = $region36
    $region35: #{commnet_forward.1} parent=5 // pred_region
      %s2413 = ssub.s32 %s8, 2
      // Predicated region
      $region37: #{commnet_forward.1} parent=35 // pred_check
        %p2414 = pneg %p84
      $region38: #{commnet_forward.1} parent=35 // pred_check_branch
        %2416 = sbr.rel (%p2414) target = $region40
      $region39: #{commnet_forward.1} parent=35 // pred_region
        %s2417 = smul.u32 32, %s14
        %p2418 = scmp.lt.s32.totalorder %s2417, 63
        %s2419 = scalar_select %p2418, %s2417, 63
        %s2420 = smul.addr %s2419, 8
        %s2421 = scalar_lea.vmem %s2, %s2420
      $region40: #{commnet_forward.1} parent=35 // pred_fallthru
        _
    $region36: #{commnet_forward.1} parent=5 // pred_fallthru
      _
  $region6: #{commnet_forward.1} parent=0 // loop_footer
    %s12 = sadd.s32 1, %s8
  $region7: #{commnet_forward.1} parent=0 // loop_footer_branch
    %7 = sbr.rel target = $region3
  $region8: #{commnet_forward.1} parent=0 // loop_exit
    _

</llo_original>
